<compile_context>
chip_gen: v7x
topology: tpu7x:2x2x1
jax: 0.10.0
libtpu: 0.0.40
codegen_flags: <defaults>
</compile_context>

<pallas_src>
import functools

import jax
import jax.numpy as jnp
from jax.experimental import pallas as pl
from jax.experimental.pallas import tpu as pltpu


def _round_up(x, m):
    return ((x + m - 1) // m) * m


def _pick_batch_tile(B, D, H, C_in, C_out_p, budget_bytes=20 * 1024 * 1024):
    """Largest TB dividing B whose per-step working set fits a conservative VMEM budget."""
    per_slice = (
        2 * (D + 2) * H * (3 * C_in) * 2   # kh-merged input block, 2 buffers, bf16
        + 2 * D * H * C_out_p * 2          # conv output block, 2 buffers, bf16
        + 3 * D * H * C_out_p * 4          # f32 accumulator + temporaries
    )
    cap = max(1, budget_bytes // per_slice)
    for tb in range(min(B, cap), 0, -1):
        if B % tb == 0 and (tb * D * H) % 8 == 0:
            return tb
    return B   # fall back to one full-array block (always layout-legal)


def _pick_row_tile(R, max_rows=2048):
    for tr in range(min(R, max_rows), 0, -1):
        if R % tr == 0 and (tr % 8 == 0 or tr == R):
            return tr
    return R


# ----------------------------------------------------------------------------
# Kernel 1: TB (n,w)-slices of the 3x3 conv as 3 MXU matmuls (kh taps merged
# into the contraction dim), plus per-grid-block partial sum / sum-of-squares
# for train-mode BatchNorm statistics.
# ----------------------------------------------------------------------------
def _conv_stats_kernel(x_ref, w_ref, conv_ref, psum_ref, psumsq_ref, *, TB, D, H):
    K = x_ref.shape[-1]                              # 3 * C_in
    M = TB * D * H

    xp = x_ref[...]                                  # (TB, D+2, H, 3*C_in) bf16
    acc = None
    for kd in range(3):
        patch = xp[:, kd:kd + D, :, :].reshape(M, K)
        c = jnp.dot(patch, w_ref[kd],                # bf16 x bf16 -> f32 on MXU
                    preferred_element_type=jnp.float32)
        acc = c if acc is None else acc + c          # init from first tap

    conv_ref[...] = acc.astype(conv_ref.dtype)       # lane-dense (M, C_out_p) store

    # Per-block partial stats (no cross-grid accumulation -> "parallel" axis OK).
    psum_ref[...] = jnp.zeros_like(psum_ref)
    psumsq_ref[...] = jnp.zeros_like(psumsq_ref)
    psum_ref[0, 0:1, :] = jnp.sum(acc, axis=0, keepdims=True)
    psumsq_ref[0, 0:1, :] = jnp.sum(acc * acc, axis=0, keepdims=True)


# ----------------------------------------------------------------------------
# Kernel 2: fused BatchNorm affine (precomputed scale/shift) + ReLU on big
# lane-dense 2D tiles of the flattened conv output.
# ----------------------------------------------------------------------------
def _bn_relu_kernel(y_ref, scale_ref, shift_ref, o_ref):
    y = y_ref[...].astype(jnp.float32)               # (TR, C_out_p)
    o_ref[...] = jnp.maximum(y * scale_ref[...] + shift_ref[...], 0.0)


def conv_3x3x1_forward(x_ncdhw, weight_oikkl, gamma, beta, eps=1e-5):
    """x_ncdhw: (N, C_in, D, H, W).  weight_oikkl: (C_out, C_in, 3, 3, 1)."""
    N, C_in, D, H, W = x_ncdhw.shape
    C_out = weight_oikkl.shape[0]
    B = N * W
    M = B * D * H
    C_out_p = _round_up(C_out, 128)
    K = 3 * C_in

    # Glue: layout change + halo pad + kh shift-concat + bf16 cast (one fused
    # XLA pass over the small C_in-channel input).
    x_cl = jnp.transpose(x_ncdhw, (0, 4, 2, 3, 1)).reshape(B, D, H, C_in)
    x_pad = jnp.pad(x_cl, ((0, 0), (1, 1), (1, 1), (0, 0))).astype(jnp.bfloat16)
    x_cat = jnp.concatenate(
        [x_pad[:, :, kh:kh + H, :] for kh in range(3)], axis=-1)   # (B, D+2, H, 3*C_in)

    # Weight (C_out, C_in, 3, 3, 1) -> (3, 3*C_in, C_out_p) bf16, C_out padded
    # once so all kernel outputs have a 128-multiple minor dim.
    w = jnp.transpose(weight_oikkl[..., 0], (2, 3, 1, 0)).reshape(3, K, C_out)
    w = jnp.pad(w, ((0, 0), (0, 0), (0, C_out_p - C_out))).astype(jnp.bfloat16)

    TB = _pick_batch_tile(B, D, H, C_in, C_out_p)
    G = B // TB

    kernel1 = functools.partial(_conv_stats_kernel, TB=TB, D=D, H=H)
    flops = 2 * 3 * M * K * C_out_p
    bytes_accessed = (x_cat.size * 2 + w.size * 2 + M * C_out_p * 2
                      + 2 * G * 8 * C_out_p * 4)

    conv_out, psum, psumsq = pl.pallas_call(
        kernel1,
        out_shape=(
            jax.ShapeDtypeStruct((M, C_out_p), jnp.bfloat16),     # bf16 intermediate
            jax.ShapeDtypeStruct((G, 8, C_out_p), jnp.float32),   # partial sums
            jax.ShapeDtypeStruct((G, 8, C_out_p), jnp.float32),   # partial sumsq
        ),
        grid_spec=pltpu.PrefetchScalarGridSpec(
            num_scalar_prefetch=0,
            grid=(G,),
            in_specs=[
                pl.BlockSpec((TB, D + 2, H, K), lambda g: (g, 0, 0, 0)),
                pl.BlockSpec((3, K, C_out_p), lambda g: (0, 0, 0)),
            ],
            out_specs=[
                pl.BlockSpec((TB * D * H, C_out_p), lambda g: (g, 0)),
                pl.BlockSpec((1, 8, C_out_p), lambda g: (g, 0, 0)),
                pl.BlockSpec((1, 8, C_out_p), lambda g: (g, 0, 0)),
            ],
        ),
        compiler_params=pltpu.CompilerParams(
            dimension_semantics=("parallel",),
            vmem_limit_bytes=48 * 1024 * 1024),
        cost_estimate=pl.CostEstimate(flops=flops, transcendentals=0,
                                      bytes_accessed=bytes_accessed),
    )(x_cat, w)

    # Glue: finish train-mode BatchNorm stats from the per-block partials.
    count = jnp.float32(M)
    ch_sum = jnp.sum(psum, axis=(0, 1))
    ch_sumsq = jnp.sum(psumsq, axis=(0, 1))
    mean = ch_sum / count
    var = jnp.maximum(ch_sumsq / count - mean * mean, 0.0)   # biased batch variance
    gamma_p = jnp.pad(gamma.astype(jnp.float32), (0, C_out_p - C_out))
    beta_p = jnp.pad(beta.astype(jnp.float32), (0, C_out_p - C_out))
    scale_v = gamma_p / jnp.sqrt(var + eps)
    shift_v = beta_p - mean * scale_v
    scale = scale_v.reshape(1, C_out_p)
    shift = shift_v.reshape(1, C_out_p)
    # TODO(synk): BatchNorm3d running_mean/running_var buffer updates (training
    # side effect only; they do not affect this forward output) are not emitted.

    TR = _pick_row_tile(M)
    out_flat = pl.pallas_call(
        _bn_relu_kernel,
        out_shape=jax.ShapeDtypeStruct((M, C_out_p), jnp.float32),
        grid_spec=pltpu.PrefetchScalarGridSpec(
            num_scalar_prefetch=0,
            grid=(M // TR,),
            in_specs=[
                pl.BlockSpec((TR, C_out_p), lambda r: (r, 0)),
                pl.BlockSpec((1, C_out_p), lambda r: (0, 0)),
                pl.BlockSpec((1, C_out_p), lambda r: (0, 0)),
            ],
            out_specs=pl.BlockSpec((TR, C_out_p), lambda r: (r, 0)),
        ),
        compiler_params=pltpu.CompilerParams(
            dimension_semantics=("parallel",),
            vmem_limit_bytes=48 * 1024 * 1024),
    )(conv_out, scale, shift)

    # Glue: drop channel padding + back to NCDHW (fused slice + transpose).
    out = out_flat.reshape(N, W, D, H, C_out_p)[..., :C_out].transpose(0, 4, 2, 3, 1)
    return out


def _reference_forward(x_ncdhw, weight_oikkl, gamma, beta, eps=1e-5):
    """Pure-JAX f32 reference of the PyTorch forward (train-mode BN, ReLU act)."""
    N, C_in, D, H, W = x_ncdhw.shape
    C_out = weight_oikkl.shape[0]
    x_cl = jnp.transpose(x_ncdhw, (0, 4, 2, 3, 1)).reshape(N * W, D, H, C_in)
    x_pad = jnp.pad(x_cl, ((0, 0), (1, 1), (1, 1), (0, 0)))
    w = jnp.transpose(weight_oikkl[..., 0], (2, 3, 1, 0)).astype(jnp.float32)
    y = jnp.zeros((N * W, D, H, C_out), jnp.float32)
    for kd in range(3):
        for kh in range(3):
            y = y + jnp.einsum('bdhc,co->bdho',
                               x_pad[:, kd:kd + D, kh:kh + H, :], w[kd, kh])
    mean = jnp.mean(y, axis=(0, 1, 2), keepdims=True)
    var = jnp.mean((y - mean) ** 2, axis=(0, 1, 2), keepdims=True)
    y = (y - mean) / jnp.sqrt(var + eps) * gamma.reshape(1, 1, 1, -1) \
        + beta.reshape(1, 1, 1, -1)
    y = jnp.maximum(y, 0.0)
    return y.reshape(N, W, D, H, C_out).transpose(0, 4, 2, 3, 1)


if __name__ == "__main__":
    # Small shapes: N=2, C_in=4, C_out=8, D=H=8, W=4  (activation = ReLU).
    N, C_in, C_out, D, H, W = 2, 4, 8, 8, 8, 4
    key = jax.random.PRNGKey(0)
    kx, kw = jax.random.split(key)
    x = jax.random.normal(kx, (N, C_in, D, H, W), dtype=jnp.float32)
    weight = jax.random.normal(kw, (C_out, C_in, 3, 3, 1), dtype=jnp.float32) * 0.1
    gamma = jnp.ones((C_out,), jnp.float32)   # BatchNorm3d default weight
    beta = jnp.zeros((C_out,), jnp.float32)   # BatchNorm3d default bias

    out = conv_3x3x1_forward(x, weight, gamma, beta)
    out = jax.block_until_ready(out)

    ref = _reference_forward(x, weight, gamma, beta)
    assert out.shape == (N, C_out, D, H, W)
    max_err = float(jnp.max(jnp.abs(out - ref)))
    # bf16 operands / bf16 conv intermediate -> tolerance appropriate for bf16.
    assert jnp.allclose(out, ref, atol=5e-2, rtol=5e-2), \
        f"mismatch vs reference (max abs err {max_err})"

    print("KERNEL_OK")
</pallas_src>

<mosaic_0001>
module attributes {stable_mosaic.version = 11 : i64} {
  func.func @_conv_stats_kernel(%arg0: i32, %arg1: memref<8x10x8x12xbf16, #tpu.memory_space<vmem>>, %arg2: memref<3x12x128xbf16, #tpu.memory_space<vmem>>, %arg3: memref<512x128xbf16, #tpu.memory_space<vmem>>, %arg4: memref<1x8x128xf32, #tpu.memory_space<vmem>>, %arg5: memref<1x8x128xf32, #tpu.memory_space<vmem>>) attributes {dimension_semantics = [#tpu.dimension_semantics<parallel>], iteration_bounds = array<i64: 1>, scalar_prefetch = 0 : i64, scratch_operands = 0 : i64, tpu.core_type = #tpu.core_type<tc>, window_params = [{transform_indices = @transform_0, window_bounds = array<i64: 8, 10, 8, 12>}, {pipeline_mode = #tpu.pipeline_mode<synchronous>, transform_indices = @transform_1, window_bounds = array<i64: 3, 12, 128>}, {transform_indices = @transform_2, window_bounds = array<i64: 512, 128>}, {transform_indices = @transform_3, window_bounds = array<i64: 1, 8, 128>}, {transform_indices = @transform_4, window_bounds = array<i64: 1, 8, 128>}]} {
    %c0 = arith.constant 0 : index
    %c0_0 = arith.constant 0 : index
    %c0_1 = arith.constant 0 : index
    %c0_2 = arith.constant 0 : index
    %0 = vector.load %arg1[%c0, %c0_0, %c0_1, %c0_2] : memref<8x10x8x12xbf16, #tpu.memory_space<vmem>>, vector<8x10x8x12xbf16>
    %1 = vector.extract_strided_slice %0 {offsets = [0, 0, 0, 0], sizes = [8, 8, 8, 12], strides = [1, 1, 1, 1]} : vector<8x10x8x12xbf16> to vector<8x8x8x12xbf16>
    %2 = vector.shape_cast %1 : vector<8x8x8x12xbf16> to vector<512x12xbf16>
    %c0_3 = arith.constant 0 : index
    %c0_4 = arith.constant 0 : index
    %c0_5 = arith.constant 0 : index
    %3 = vector.load %arg2[%c0_3, %c0_4, %c0_5] : memref<3x12x128xbf16, #tpu.memory_space<vmem>>, vector<1x12x128xbf16>
    %4 = vector.shape_cast %3 : vector<1x12x128xbf16> to vector<12x128xbf16>
    %cst = arith.constant dense<0.000000e+00> : vector<512x128xf32>
    %5 = tpu.matmul %2, %4, %cst {dimension_numbers = #tpu.dot_dimension_numbers<[1], [0], [0], [1], [0, 0, 1, 1], [], []>} : vector<512x12xbf16>, vector<12x128xbf16>, vector<512x128xf32> -> vector<512x128xf32>
    %6 = vector.extract_strided_slice %0 {offsets = [0, 1, 0, 0], sizes = [8, 8, 8, 12], strides = [1, 1, 1, 1]} : vector<8x10x8x12xbf16> to vector<8x8x8x12xbf16>
    %7 = vector.shape_cast %6 : vector<8x8x8x12xbf16> to vector<512x12xbf16>
    %c1 = arith.constant 1 : index
    %c0_6 = arith.constant 0 : index
    %c0_7 = arith.constant 0 : index
    %8 = vector.load %arg2[%c1, %c0_6, %c0_7] : memref<3x12x128xbf16, #tpu.memory_space<vmem>>, vector<1x12x128xbf16>
    %9 = vector.shape_cast %8 : vector<1x12x128xbf16> to vector<12x128xbf16>
    %cst_8 = arith.constant dense<0.000000e+00> : vector<512x128xf32>
    %10 = tpu.matmul %7, %9, %cst_8 {dimension_numbers = #tpu.dot_dimension_numbers<[1], [0], [0], [1], [0, 0, 1, 1], [], []>} : vector<512x12xbf16>, vector<12x128xbf16>, vector<512x128xf32> -> vector<512x128xf32>
    %11 = arith.addf %5, %10 : vector<512x128xf32>
    %12 = vector.extract_strided_slice %0 {offsets = [0, 2, 0, 0], sizes = [8, 8, 8, 12], strides = [1, 1, 1, 1]} : vector<8x10x8x12xbf16> to vector<8x8x8x12xbf16>
    %13 = vector.shape_cast %12 : vector<8x8x8x12xbf16> to vector<512x12xbf16>
    %c2 = arith.constant 2 : index
    %c0_9 = arith.constant 0 : index
    %c0_10 = arith.constant 0 : index
    %14 = vector.load %arg2[%c2, %c0_9, %c0_10] : memref<3x12x128xbf16, #tpu.memory_space<vmem>>, vector<1x12x128xbf16>
    %15 = vector.shape_cast %14 : vector<1x12x128xbf16> to vector<12x128xbf16>
    %cst_11 = arith.constant dense<0.000000e+00> : vector<512x128xf32>
    %16 = tpu.matmul %13, %15, %cst_11 {dimension_numbers = #tpu.dot_dimension_numbers<[1], [0], [0], [1], [0, 0, 1, 1], [], []>} : vector<512x12xbf16>, vector<12x128xbf16>, vector<512x128xf32> -> vector<512x128xf32>
    %17 = arith.addf %11, %16 : vector<512x128xf32>
    %18 = arith.truncf %17 : vector<512x128xf32> to vector<512x128xbf16>
    %c0_12 = arith.constant 0 : index
    %c0_13 = arith.constant 0 : index
    %19 = vector.load %arg3[%c0_12, %c0_13] : memref<512x128xbf16, #tpu.memory_space<vmem>>, vector<512x128xbf16>
    tpu.vector_store %arg3[%c0_12, %c0_13], %18 {strides = array<i32>} : memref<512x128xbf16, #tpu.memory_space<vmem>>, vector<512x128xbf16>,
    %cst_14 = arith.constant 0.000000e+00 : f32
    %20 = vector.broadcast %cst_14 : f32 to vector<1x8x128xf32>
    %c0_15 = arith.constant 0 : index
    %c0_16 = arith.constant 0 : index
    %c0_17 = arith.constant 0 : index
    %21 = vector.load %arg4[%c0_15, %c0_16, %c0_17] : memref<1x8x128xf32, #tpu.memory_space<vmem>>, vector<1x8x128xf32>
    tpu.vector_store %arg4[%c0_15, %c0_16, %c0_17], %20 {strides = array<i32>} : memref<1x8x128xf32, #tpu.memory_space<vmem>>, vector<1x8x128xf32>,
    %cst_18 = arith.constant 0.000000e+00 : f32
    %22 = vector.broadcast %cst_18 : f32 to vector<1x8x128xf32>
    %c0_19 = arith.constant 0 : index
    %c0_20 = arith.constant 0 : index
    %c0_21 = arith.constant 0 : index
    %23 = vector.load %arg5[%c0_19, %c0_20, %c0_21] : memref<1x8x128xf32, #tpu.memory_space<vmem>>, vector<1x8x128xf32>
    tpu.vector_store %arg5[%c0_19, %c0_20, %c0_21], %22 {strides = array<i32>} : memref<1x8x128xf32, #tpu.memory_space<vmem>>, vector<1x8x128xf32>,
    %cst_22 = arith.constant dense<0.000000e+00> : vector<128xf32>
    %24 = vector.multi_reduction <add>, %17, %cst_22 [0] : vector<512x128xf32> to vector<128xf32>
    %25 = vector.shape_cast %24 : vector<128xf32> to vector<1x128xf32>
    %c0_23 = arith.constant 0 : index
    %c0_24 = arith.constant 0 : index
    %c0_25 = arith.constant 0 : index
    %26 = vector.load %arg4[%c0_23, %c0_24, %c0_25] : memref<1x8x128xf32, #tpu.memory_space<vmem>>, vector<1x1x128xf32>
    %27 = vector.shape_cast %26 : vector<1x1x128xf32> to vector<1x128xf32>
    %28 = vector.shape_cast %25 : vector<1x128xf32> to vector<1x1x128xf32>
    tpu.vector_store %arg4[%c0_23, %c0_24, %c0_25], %28 {strides = array<i32>} : memref<1x8x128xf32, #tpu.memory_space<vmem>>, vector<1x1x128xf32>,
    %29 = arith.mulf %17, %17 : vector<512x128xf32>
    %cst_26 = arith.constant dense<0.000000e+00> : vector<128xf32>
    %30 = vector.multi_reduction <add>, %29, %cst_26 [0] : vector<512x128xf32> to vector<128xf32>
    %31 = vector.shape_cast %30 : vector<128xf32> to vector<1x128xf32>
    %c0_27 = arith.constant 0 : index
    %c0_28 = arith.constant 0 : index
    %c0_29 = arith.constant 0 : index
    %32 = vector.load %arg5[%c0_27, %c0_28, %c0_29] : memref<1x8x128xf32, #tpu.memory_space<vmem>>, vector<1x1x128xf32>
    %33 = vector.shape_cast %32 : vector<1x1x128xf32> to vector<1x128xf32>
    %34 = vector.shape_cast %31 : vector<1x128xf32> to vector<1x1x128xf32>
    tpu.vector_store %arg5[%c0_27, %c0_28, %c0_29], %34 {strides = array<i32>} : memref<1x8x128xf32, #tpu.memory_space<vmem>>, vector<1x1x128xf32>,
    return
  }
  func.func @transform_0(%arg0: i32) -> (i32, i32, i32, i32) {
    %c0_i32 = arith.constant 0 : i32
    %c0_i32_0 = arith.constant 0 : i32
    %c0_i32_1 = arith.constant 0 : i32
    %c0_i32_2 = arith.constant 0 : i32
    return %arg0, %c0_i32, %c0_i32_0, %c0_i32_1 : i32, i32, i32, i32
  }
  func.func @transform_1(%arg0: i32) -> (i32, i32, i32) {
    %c0_i32 = arith.constant 0 : i32
    %c0_i32_0 = arith.constant 0 : i32
    %c0_i32_1 = arith.constant 0 : i32
    %c0_i32_2 = arith.constant 0 : i32
    return %c0_i32, %c0_i32_0, %c0_i32_1 : i32, i32, i32
  }
  func.func @transform_2(%arg0: i32) -> (i32, i32) {
    %c0_i32 = arith.constant 0 : i32
    %c0_i32_0 = arith.constant 0 : i32
    return %arg0, %c0_i32 : i32, i32
  }
  func.func @transform_3(%arg0: i32) -> (i32, i32, i32) {
    %c0_i32 = arith.constant 0 : i32
    %c0_i32_0 = arith.constant 0 : i32
    %c0_i32_1 = arith.constant 0 : i32
    return %arg0, %c0_i32, %c0_i32_0 : i32, i32, i32
  }
  func.func @transform_4(%arg0: i32) -> (i32, i32, i32) {
    %c0_i32 = arith.constant 0 : i32
    %c0_i32_0 = arith.constant 0 : i32
    %c0_i32_1 = arith.constant 0 : i32
    return %arg0, %c0_i32, %c0_i32_0 : i32, i32, i32
  }
}

</mosaic_0001>

<llo_original>
// kernel: tpu_custom_call.1
$region0: #{tpu_custom_call.1}
  #allocation0 [shape = 'u32[]', space=smem, size = 0x4, offset = 0x4, fixed_abs, tag = 'smem constant byte address 0x4 - core index']
  #allocation1 [shape = 'u32[144,128]{1,0:T(1,128)}', space=vmem, size = 0x12000, scoped, tag = 'internal scratch']
  %s0 = inlined_call_operand.hbm [shape: bf16[8,10,8,12], index: 0, kind: input, shape index: {}]
  %s1 = inlined_call_operand.hbm [shape: bf16[3,12,128], index: 1, kind: input, shape index: {}]
  %s2 = inlined_call_operand.hbm [shape: bf16[512,128], index: 2, kind: output, shape index: {0}]
  %s3 = inlined_call_operand.hbm [shape: f32[1,8,128], index: 3, kind: output, shape index: {1}]
  %s4 = inlined_call_operand.hbm [shape: f32[1,8,128], index: 4, kind: output, shape index: {2}]
  %5 = xla_tuple %s2, %s3, %s4
  %s6 = sld [smem:[#allocation0]]
  $region42: #{tpu_custom_call.1} parent=0
    _
  %s8 = ssub.s32 1, %s6
  %s9 = scalar_select 0, %s8, %s6
  $region1: #{tpu_custom_call.1} parent=0
    #allocation2 [shape = 'u8[163840]{0}', space=vmem, size = 0x28000, scoped, tag = 'input window, operand 0, single buffered']
    #allocation3 [shape = 's32[1]{0}', space=sflag, size = 0x4, scoped, tag = 'scoped memory for tpu_custom_call.1']
    #allocation4 [shape = 's32[1]{0}', space=sflag, size = 0x4, scoped, tag = 'scoped memory for tpu_custom_call.1']
    #allocation5 [shape = 'u8[12288]{0}', space=vmem, size = 0x3000, scoped, tag = 'input window, operand 1, single buffered']
    #allocation6 [shape = 's32[1]{0}', space=sflag, size = 0x4, scoped, tag = 'scoped memory for tpu_custom_call.1']
    #allocation7 [shape = 'u8[131072]{0}', space=vmem, size = 0x20000, scoped, tag = 'output window, operand 0, single buffered']
    #allocation8 [shape = 'u8[4096]{0}', space=vmem, size = 0x1000, scoped, tag = 'output window, operand 1, single buffered']
    #allocation9 [shape = 's32[1]{0}', space=sflag, size = 0x4, scoped, tag = 'scoped memory for tpu_custom_call.1']
    #allocation10 [shape = 'u8[4096]{0}', space=vmem, size = 0x1000, scoped, tag = 'output window, operand 2, single buffered']
    %10 = vsyncpa [#allocation3], 0
    %11 = vsyncpa [#allocation6], 0
    %12 = vsyncpa [#allocation4], 0
    %13 = vsyncpa [#allocation9], 0
    // Predicated region
    $region2: #{tpu_custom_call.1} parent=1 // pred_check
      _
    $region3: #{tpu_custom_call.1} parent=1 // pred_check_branch
      %15 = sbr.rel (0) target = $region5
    $region4: #{tpu_custom_call.1} parent=1 // pred_region
      %s17 = ssub.s32 5120, 5120
      %18 = vsyncadd [#allocation3], %s17
      %s19 = sshll.u32 [#allocation2], 4
      %s20 = int_to_ptr.vmem [resolvable:$true] %s19
      %25 = dma.hbm_to_vmem [thread:$0]  %s0, 5120, %s20, [#allocation3], 64, 64, 4
    $region5: #{tpu_custom_call.1} parent=1 // pred_fallthru
      _
    // Predicated region
    $region6: #{tpu_custom_call.1} parent=1 // pred_check
      _
    $region7: #{tpu_custom_call.1} parent=1 // pred_check_branch
      %27 = sbr.rel (0) target = $region9
    $region8: #{tpu_custom_call.1} parent=1 // pred_region
      %s29 = ssub.s32 384, 384
      %30 = vsyncadd [#allocation6], %s29
      %s31 = sshll.u32 [#allocation5], 4
      %s32 = int_to_ptr.vmem [resolvable:$true] %s31
      %37 = dma.hbm_to_vmem [thread:$0]  %s1, 384, %s32, [#allocation6], 64, 64, 4
    $region9: #{tpu_custom_call.1} parent=1 // pred_fallthru
      _
    // Predicated region
    $region10: #{tpu_custom_call.1} parent=1 // pred_check
      _
    $region11: #{tpu_custom_call.1} parent=1 // pred_check_branch
      %39 = sbr.rel (0) target = $region13
    $region12: #{tpu_custom_call.1} parent=1 // pred_region
      %40 = dma.done [#allocation3], 5120
    $region13: #{tpu_custom_call.1} parent=1 // pred_fallthru
      _
    // Predicated region
    $region14: #{tpu_custom_call.1} parent=1 // pred_check
      _
    $region15: #{tpu_custom_call.1} parent=1 // pred_check_branch
      %42 = sbr.rel (0) target = $region17
    $region16: #{tpu_custom_call.1} parent=1 // pred_region
      %43 = dma.done [#allocation6], 384
    $region17: #{tpu_custom_call.1} parent=1 // pred_fallthru
      _
    %v45 = vld [vmem:[#allocation2] sm:$0xf]
    %v46 = vld [vmem:[#allocation2 + $0x4] sm:$0xf]
    %v47 = vld [vmem:[#allocation2 + $0x8] sm:$0xf]
    %v48 = vld [vmem:[#allocation2 + $0xc] sm:$0xf]
    %v49 = vld [vmem:[#allocation2 + $0x10] sm:$0xf]
    %v50 = vld [vmem:[#allocation2 + $0x14] sm:$0xf]
    %v51 = vld [vmem:[#allocation2 + $0x18] sm:$0xf]
    %v52 = vld [vmem:[#allocation2 + $0x1c] sm:$0xf]
    %v53 = vld [vmem:[#allocation2 + $0x20] sm:$0xf]
    %v54 = vld [vmem:[#allocation2 + $0x24] sm:$0xf]
    %v55 = vld [vmem:[#allocation2 + $0x28] sm:$0xf]
    %v56 = vld [vmem:[#allocation2 + $0x2c] sm:$0xf]
    %v57 = vld [vmem:[#allocation2 + $0x30] sm:$0xf]
    %v58 = vld [vmem:[#allocation2 + $0x34] sm:$0xf]
    %v59 = vld [vmem:[#allocation2 + $0x38] sm:$0xf]
    %v60 = vld [vmem:[#allocation2 + $0x3c] sm:$0xf]
    %v61 = vld [vmem:[#allocation2 + $0x40] sm:$0xf]
    %v62 = vld [vmem:[#allocation2 + $0x44] sm:$0xf]
    %v63 = vld [vmem:[#allocation2 + $0x48] sm:$0xf]
    %v64 = vld [vmem:[#allocation2 + $0x4c] sm:$0xf]
    %v65 = vld [vmem:[#allocation2 + $0x50] sm:$0xf]
    %v66 = vld [vmem:[#allocation2 + $0x54] sm:$0xf]
    %v67 = vld [vmem:[#allocation2 + $0x58] sm:$0xf]
    %v68 = vld [vmem:[#allocation2 + $0x5c] sm:$0xf]
    %v69 = vld [vmem:[#allocation2 + $0x60] sm:$0xf]
    %v70 = vld [vmem:[#allocation2 + $0x64] sm:$0xf]
    %v71 = vld [vmem:[#allocation2 + $0x68] sm:$0xf]
    %v72 = vld [vmem:[#allocation2 + $0x6c] sm:$0xf]
    %v73 = vld [vmem:[#allocation2 + $0x70] sm:$0xf]
    %v74 = vld [vmem:[#allocation2 + $0x74] sm:$0xf]
    %v75 = vld [vmem:[#allocation2 + $0x78] sm:$0xf]
    %v76 = vld [vmem:[#allocation2 + $0x7c] sm:$0xf]
    %v77 = vld [vmem:[#allocation2 + $0x80] sm:$0xf]
    %v78 = vld [vmem:[#allocation2 + $0x84] sm:$0xf]
    %v79 = vld [vmem:[#allocation2 + $0x88] sm:$0xf]
    %v80 = vld [vmem:[#allocation2 + $0x8c] sm:$0xf]
    %v81 = vld [vmem:[#allocation2 + $0x90] sm:$0xf]
    %v82 = vld [vmem:[#allocation2 + $0x94] sm:$0xf]
    %v83 = vld [vmem:[#allocation2 + $0x98] sm:$0xf]
    %v84 = vld [vmem:[#allocation2 + $0x9c] sm:$0xf]
    %v85 = vld [vmem:[#allocation2 + $0xa0] sm:$0xf]
    %v86 = vld [vmem:[#allocation2 + $0xa4] sm:$0xf]
    %v87 = vld [vmem:[#allocation2 + $0xa8] sm:$0xf]
    %v88 = vld [vmem:[#allocation2 + $0xac] sm:$0xf]
    %v89 = vld [vmem:[#allocation2 + $0xb0] sm:$0xf]
    %v90 = vld [vmem:[#allocation2 + $0xb4] sm:$0xf]
    %v91 = vld [vmem:[#allocation2 + $0xb8] sm:$0xf]
    %v92 = vld [vmem:[#allocation2 + $0xbc] sm:$0xf]
    %v93 = vld [vmem:[#allocation2 + $0xc0] sm:$0xf]
    %v94 = vld [vmem:[#allocation2 + $0xc4] sm:$0xf]
    %v95 = vld [vmem:[#allocation2 + $0xc8] sm:$0xf]
    %v96 = vld [vmem:[#allocation2 + $0xcc] sm:$0xf]
    %v97 = vld [vmem:[#allocation2 + $0xd0] sm:$0xf]
    %v98 = vld [vmem:[#allocation2 + $0xd4] sm:$0xf]
    %v99 = vld [vmem:[#allocation2 + $0xd8] sm:$0xf]
    %v100 = vld [vmem:[#allocation2 + $0xdc] sm:$0xf]
    %v101 = vld [vmem:[#allocation2 + $0xe0] sm:$0xf]
    %v102 = vld [vmem:[#allocation2 + $0xe4] sm:$0xf]
    %v103 = vld [vmem:[#allocation2 + $0xe8] sm:$0xf]
    %v104 = vld [vmem:[#allocation2 + $0xec] sm:$0xf]
    %v105 = vld [vmem:[#allocation2 + $0xf0] sm:$0xf]
    %v106 = vld [vmem:[#allocation2 + $0xf4] sm:$0xf]
    %v107 = vld [vmem:[#allocation2 + $0xf8] sm:$0xf]
    %v108 = vld [vmem:[#allocation2 + $0xfc] sm:$0xf]
    %v109 = vld [vmem:[#allocation2 + $0x100] sm:$0xf]
    %v110 = vld [vmem:[#allocation2 + $0x104] sm:$0xf]
    %v111 = vld [vmem:[#allocation2 + $0x108] sm:$0xf]
    %v112 = vld [vmem:[#allocation2 + $0x10c] sm:$0xf]
    %v113 = vld [vmem:[#allocation2 + $0x110] sm:$0xf]
    %v114 = vld [vmem:[#allocation2 + $0x114] sm:$0xf]
    %v115 = vld [vmem:[#allocation2 + $0x118] sm:$0xf]
    %v116 = vld [vmem:[#allocation2 + $0x11c] sm:$0xf]
    %v117 = vld [vmem:[#allocation2 + $0x120] sm:$0xf]
    %v118 = vld [vmem:[#allocation2 + $0x124] sm:$0xf]
    %v119 = vld [vmem:[#allocation2 + $0x128] sm:$0xf]
    %v120 = vld [vmem:[#allocation2 + $0x12c] sm:$0xf]
    %v121 = vld [vmem:[#allocation2 + $0x130] sm:$0xf]
    %v122 = vld [vmem:[#allocation2 + $0x134] sm:$0xf]
    %v123 = vld [vmem:[#allocation2 + $0x138] sm:$0xf]
    %v124 = vld [vmem:[#allocation2 + $0x13c] sm:$0xf]
    %v125 = vld [vmem:[#allocation5] sm:$0xf]
    %v126 = vld [vmem:[#allocation5 + $0x4] sm:$0x3]
    %s127 = scalar_lea.vmem [#allocation5], 8
    %v128 = vld [vmem:[%s127] sm:$0xf]
    %v129 = vld [vmem:[%s127 + $0x4] sm:$0x3]
    %v194 = vunpack.c.l.b16 %v46
    %v195 = vunpack.c.l.b16 %v47
    %v196 = vunpack.c.l.b16 %v48
    %v197 = vunpack.c.l.b16 %v49
    %v198 = vunpack.c.l.b16 %v50
    %v199 = vunpack.c.l.b16 %v51
    %v200 = vunpack.c.l.b16 %v52
    %v201 = vunpack.c.l.b16 %v53
    %v202 = vunpack.c.l.b16 %v56
    %v203 = vunpack.c.l.b16 %v57
    %v204 = vunpack.c.l.b16 %v58
    %v205 = vunpack.c.l.b16 %v59
    %v206 = vunpack.c.l.b16 %v60
    %v207 = vunpack.c.l.b16 %v61
    %v208 = vunpack.c.l.b16 %v62
    %v209 = vunpack.c.l.b16 %v63
    %v210 = vunpack.c.l.b16 %v66
    %v211 = vunpack.c.l.b16 %v67
    %v212 = vunpack.c.l.b16 %v68
    %v213 = vunpack.c.l.b16 %v69
    %v214 = vunpack.c.l.b16 %v70
    %v215 = vunpack.c.l.b16 %v71
    %v216 = vunpack.c.l.b16 %v72
    %v217 = vunpack.c.l.b16 %v73
    %v218 = vunpack.c.l.b16 %v76
    %v219 = vunpack.c.l.b16 %v77
    %v220 = vunpack.c.l.b16 %v78
    %v221 = vunpack.c.l.b16 %v79
    %v222 = vunpack.c.l.b16 %v80
    %v223 = vunpack.c.l.b16 %v81
    %v224 = vunpack.c.l.b16 %v82
    %v225 = vunpack.c.l.b16 %v83
    %v226 = vunpack.c.l.b16 %v86
    %v227 = vunpack.c.l.b16 %v87
    %v228 = vunpack.c.l.b16 %v88
    %v229 = vunpack.c.l.b16 %v89
    %v230 = vunpack.c.l.b16 %v90
    %v231 = vunpack.c.l.b16 %v91
    %v232 = vunpack.c.l.b16 %v92
    %v233 = vunpack.c.l.b16 %v93
    %v234 = vunpack.c.l.b16 %v96
    %v235 = vunpack.c.l.b16 %v97
    %v236 = vunpack.c.l.b16 %v98
    %v237 = vunpack.c.l.b16 %v99
    %v238 = vunpack.c.l.b16 %v100
    %v239 = vunpack.c.l.b16 %v101
    %v240 = vunpack.c.l.b16 %v102
    %v241 = vunpack.c.l.b16 %v103
    %v242 = vunpack.c.l.b16 %v106
    %v243 = vunpack.c.l.b16 %v107
    %v244 = vunpack.c.l.b16 %v108
    %v245 = vunpack.c.l.b16 %v109
    %v246 = vunpack.c.l.b16 %v110
    %v247 = vunpack.c.l.b16 %v111
    %v248 = vunpack.c.l.b16 %v112
    %v249 = vunpack.c.l.b16 %v113
    %v250 = vunpack.c.l.b16 %v116
    %v251 = vunpack.c.l.b16 %v117
    %v252 = vunpack.c.l.b16 %v118
    %v253 = vunpack.c.l.b16 %v119
    %v254 = vunpack.c.l.b16 %v120
    %v255 = vunpack.c.l.b16 %v121
    %v256 = vunpack.c.l.b16 %v122
    %v257 = vunpack.c.l.b16 %v123
    %v258 = vpack.c.b16 %v195, %v194
    %v259 = vpack.c.b16 %v197, %v196
    %v260 = vpack.c.b16 %v199, %v198
    %v261 = vpack.c.b16 %v201, %v200
    %v262 = vpack.c.b16 %v203, %v202
    %v263 = vpack.c.b16 %v205, %v204
    %v264 = vpack.c.b16 %v207, %v206
    %v265 = vpack.c.b16 %v209, %v208
    %v266 = vpack.c.b16 %v211, %v210
    %v267 = vpack.c.b16 %v213, %v212
    %v268 = vpack.c.b16 %v215, %v214
    %v269 = vpack.c.b16 %v217, %v216
    %v270 = vpack.c.b16 %v219, %v218
    %v271 = vpack.c.b16 %v221, %v220
    %v272 = vpack.c.b16 %v223, %v222
    %v273 = vpack.c.b16 %v225, %v224
    %v274 = vpack.c.b16 %v227, %v226
    %v275 = vpack.c.b16 %v229, %v228
    %v276 = vpack.c.b16 %v231, %v230
    %v277 = vpack.c.b16 %v233, %v232
    %v278 = vpack.c.b16 %v235, %v234
    %v279 = vpack.c.b16 %v237, %v236
    %v280 = vpack.c.b16 %v239, %v238
    %v281 = vpack.c.b16 %v241, %v240
    %v282 = vpack.c.b16 %v243, %v242
    %v283 = vpack.c.b16 %v245, %v244
    %v284 = vpack.c.b16 %v247, %v246
    %v285 = vpack.c.b16 %v249, %v248
    %v286 = vpack.c.b16 %v251, %v250
    %v287 = vpack.c.b16 %v253, %v252
    %v288 = vpack.c.b16 %v255, %v254
    %v289 = vpack.c.b16 %v257, %v256
    %v292 = vunpack.c.l.b16 %v128
    %v293 = vunpack.c.l.b16 %v129
    %v294 = vpack.c.b16 %v293, %v292
    %vm295 = vcmask 97280
    %v297 = vsel %vm295, %v258, 0
    %v300 = vsel %vm295, %v259, 0
    %v303 = vsel %vm295, %v260, 0
    %v306 = vsel %vm295, %v261, 0
    %v309 = vsel %vm295, %v262, 0
    %v312 = vsel %vm295, %v263, 0
    %v315 = vsel %vm295, %v264, 0
    %v318 = vsel %vm295, %v265, 0
    %v321 = vsel %vm295, %v266, 0
    %v324 = vsel %vm295, %v267, 0
    %v327 = vsel %vm295, %v268, 0
    %v330 = vsel %vm295, %v269, 0
    %v333 = vsel %vm295, %v270, 0
    %v336 = vsel %vm295, %v271, 0
    %v339 = vsel %vm295, %v272, 0
    %v342 = vsel %vm295, %v273, 0
    %v345 = vsel %vm295, %v274, 0
    %v348 = vsel %vm295, %v275, 0
    %v351 = vsel %vm295, %v276, 0
    %v354 = vsel %vm295, %v277, 0
    %v357 = vsel %vm295, %v278, 0
    %v360 = vsel %vm295, %v279, 0
    %v363 = vsel %vm295, %v280, 0
    %v366 = vsel %vm295, %v281, 0
    %v369 = vsel %vm295, %v282, 0
    %v372 = vsel %vm295, %v283, 0
    %v375 = vsel %vm295, %v284, 0
    %v378 = vsel %vm295, %v285, 0
    %v381 = vsel %vm295, %v286, 0
    %v384 = vsel %vm295, %v287, 0
    %v387 = vsel %vm295, %v288, 0
    %v390 = vsel %vm295, %v289, 0
    %vm392 = vcmask 1045504
    %v394 = vsel %vm392, %v294, 0
    %396 = vmatprep.subr.bf16.mxu0 0
    %397 = vmatpush1.bf16.msra.mxu0 %v394
    %398 = vmatprep.subr.bf16.mxu0 0
    %399 = vmatpush1.bf16.msra.mxu0 0
    %400 = vmatprep.subr.bf16.mxu0 0
    %401 = vmatpush1.bf16.msra.mxu0 0
    %402 = vmatprep.subr.bf16.mxu0 0
    %403 = vmatpush1.bf16.msra.mxu0 0
    %404 = vmatprep.subr.bf16.mxu0 0
    %405 = vmatpush1.bf16.msra.mxu0 0
    %406 = vmatprep.subr.bf16.mxu0 0
    %407 = vmatpush1.bf16.msra.mxu0 0
    %408 = vmatprep.subr.bf16.mxu0 0
    %409 = vmatpush1.bf16.msra.mxu0 0
    %410 = vmatprep.subr.bf16.mxu0 0
    %411 = vmatpush1.bf16.msra.mxu0 0
    %412 = vmatprep.subr.bf16.mxu0 0
    %413 = vmatpush1.bf16.msra.mxu0 0
    %414 = vmatprep.subr.bf16.mxu0 0
    %415 = vmatpush1.bf16.msra.mxu0 0
    %416 = vmatprep.subr.bf16.mxu0 0
    %417 = vmatpush1.bf16.msra.mxu0 0
    %418 = vmatprep.subr.bf16.mxu0 0
    %419 = vmatpush1.bf16.msra.mxu0 0
    %420 = vmatprep.subr.bf16.mxu0 0
    %421 = vmatpush1.bf16.msra.mxu0 0
    %422 = vmatprep.subr.bf16.mxu0 0
    %423 = vmatpush1.bf16.msra.mxu0 0
    %424 = vmatprep.subr.bf16.mxu0 0
    %425 = vmatpush1.bf16.msra.mxu0 0
    %426 = vmatprep.subr.bf16.mxu0 0
    %427 = vmatpush1.bf16.msra.mxu0 0
    %428 = vmatprep.mubr.bf16.mxu0 0
    %429 = vmatmul.mubr.bf16.gmra.mrb[0].mxu0 %v297
    %v430 = vpop.f32.mrb[0].mxu0
    %v431 = vadd.f32 0.0, %v430
    %v432 = vpop.f32.mrb[0].mxu0
    %v433 = vpop.f32.mrb[0].mxu0
    %v434 = vadd.f32 0.0, %v433
    %v435 = vpop.f32.mrb[0].mxu0
    %436 = vmatprep.mubr.bf16.mxu0 0
    %437 = vmatmul.mubr.bf16.gmra.mrb[0].mxu0 %v300
    %v438 = vpop.f32.mrb[0].mxu0
    %v439 = vadd.f32 0.0, %v438
    %v440 = vpop.f32.mrb[0].mxu0
    %v441 = vpop.f32.mrb[0].mxu0
    %v442 = vadd.f32 0.0, %v441
    %v443 = vpop.f32.mrb[0].mxu0
    %444 = vmatprep.mubr.bf16.mxu0 0
    %445 = vmatmul.mubr.bf16.gmra.mrb[0].mxu0 %v303
    %v446 = vpop.f32.mrb[0].mxu0
    %v447 = vadd.f32 0.0, %v446
    %v448 = vpop.f32.mrb[0].mxu0
    %v449 = vpop.f32.mrb[0].mxu0
    %v450 = vadd.f32 0.0, %v449
    %v451 = vpop.f32.mrb[0].mxu0
    %452 = vmatprep.mubr.bf16.mxu0 0
    %453 = vmatmul.mubr.bf16.gmra.mrb[0].mxu0 %v306
    %v454 = vpop.f32.mrb[0].mxu0
    %v455 = vadd.f32 0.0, %v454
    %v456 = vpop.f32.mrb[0].mxu0
    %v457 = vpop.f32.mrb[0].mxu0
    %v458 = vadd.f32 0.0, %v457
    %v459 = vpop.f32.mrb[0].mxu0
    %460 = vmatprep.mubr.bf16.mxu0 0
    %461 = vmatmul.mubr.bf16.gmra.mrb[0].mxu0 %v309
    %v462 = vpop.f32.mrb[0].mxu0
    %v463 = vadd.f32 0.0, %v462
    %v464 = vpop.f32.mrb[0].mxu0
    %v465 = vpop.f32.mrb[0].mxu0
    %v466 = vadd.f32 0.0, %v465
    %v467 = vpop.f32.mrb[0].mxu0
    %468 = vmatprep.mubr.bf16.mxu0 0
    %469 = vmatmul.mubr.bf16.gmra.mrb[0].mxu0 %v312
    %v470 = vpop.f32.mrb[0].mxu0
    %v471 = vadd.f32 0.0, %v470
    %v472 = vpop.f32.mrb[0].mxu0
    %v473 = vpop.f32.mrb[0].mxu0
    %v474 = vadd.f32 0.0, %v473
    %v475 = vpop.f32.mrb[0].mxu0
    %476 = vmatprep.mubr.bf16.mxu0 0
    %477 = vmatmul.mubr.bf16.gmra.mrb[0].mxu0 %v315
    %v478 = vpop.f32.mrb[0].mxu0
    %v479 = vadd.f32 0.0, %v478
    %v480 = vpop.f32.mrb[0].mxu0
    %v481 = vpop.f32.mrb[0].mxu0
    %v482 = vadd.f32 0.0, %v481
    %v483 = vpop.f32.mrb[0].mxu0
    %484 = vmatprep.mubr.bf16.mxu0 0
    %485 = vmatmul.mubr.bf16.gmra.mrb[0].mxu0 %v318
    %v486 = vpop.f32.mrb[0].mxu0
    %v487 = vadd.f32 0.0, %v486
    %v488 = vpop.f32.mrb[0].mxu0
    %v489 = vpop.f32.mrb[0].mxu0
    %v490 = vadd.f32 0.0, %v489
    %v491 = vpop.f32.mrb[0].mxu0
    %492 = vmatprep.mubr.bf16.mxu0 0
    %493 = vmatmul.mubr.bf16.gmra.mrb[0].mxu0 %v321
    %v494 = vpop.f32.mrb[0].mxu0
    %v495 = vadd.f32 0.0, %v494
    %v496 = vpop.f32.mrb[0].mxu0
    %v497 = vpop.f32.mrb[0].mxu0
    %v498 = vadd.f32 0.0, %v497
    %v499 = vpop.f32.mrb[0].mxu0
    %500 = vmatprep.mubr.bf16.mxu0 0
    %501 = vmatmul.mubr.bf16.gmra.mrb[0].mxu0 %v324
    %v502 = vpop.f32.mrb[0].mxu0
    %v503 = vadd.f32 0.0, %v502
    %v504 = vpop.f32.mrb[0].mxu0
    %v505 = vpop.f32.mrb[0].mxu0
    %v506 = vadd.f32 0.0, %v505
    %v507 = vpop.f32.mrb[0].mxu0
    %508 = vmatprep.mubr.bf16.mxu0 0
    %509 = vmatmul.mubr.bf16.gmra.mrb[0].mxu0 %v327
    %v510 = vpop.f32.mrb[0].mxu0
    %v511 = vadd.f32 0.0, %v510
    %v512 = vpop.f32.mrb[0].mxu0
    %v513 = vpop.f32.mrb[0].mxu0
    %v514 = vadd.f32 0.0, %v513
    %v515 = vpop.f32.mrb[0].mxu0
    %516 = vmatprep.mubr.bf16.mxu0 0
    %517 = vmatmul.mubr.bf16.gmra.mrb[0].mxu0 %v330
    %v518 = vpop.f32.mrb[0].mxu0
    %v519 = vadd.f32 0.0, %v518
    %v520 = vpop.f32.mrb[0].mxu0
    %v521 = vpop.f32.mrb[0].mxu0
    %v522 = vadd.f32 0.0, %v521
    %v523 = vpop.f32.mrb[0].mxu0
    %524 = vmatprep.mubr.bf16.mxu0 0
    %525 = vmatmul.mubr.bf16.gmra.mrb[0].mxu0 %v333
    %v526 = vpop.f32.mrb[0].mxu0
    %v527 = vadd.f32 0.0, %v526
    %v528 = vpop.f32.mrb[0].mxu0
    %v529 = vpop.f32.mrb[0].mxu0
    %v530 = vadd.f32 0.0, %v529
    %v531 = vpop.f32.mrb[0].mxu0
    %532 = vmatprep.mubr.bf16.mxu0 0
    %533 = vmatmul.mubr.bf16.gmra.mrb[0].mxu0 %v336
    %v534 = vpop.f32.mrb[0].mxu0
    %v535 = vadd.f32 0.0, %v534
    %v536 = vpop.f32.mrb[0].mxu0
    %v537 = vpop.f32.mrb[0].mxu0
    %v538 = vadd.f32 0.0, %v537
    %v539 = vpop.f32.mrb[0].mxu0
    %540 = vmatprep.mubr.bf16.mxu0 0
    %541 = vmatmul.mubr.bf16.gmra.mrb[0].mxu0 %v339
    %v542 = vpop.f32.mrb[0].mxu0
    %v543 = vadd.f32 0.0, %v542
    %v544 = vpop.f32.mrb[0].mxu0
    %v545 = vpop.f32.mrb[0].mxu0
    %v546 = vadd.f32 0.0, %v545
    %v547 = vpop.f32.mrb[0].mxu0
    %548 = vmatprep.mubr.bf16.mxu0 0
    %549 = vmatmul.mubr.bf16.gmra.mrb[0].mxu0 %v342
    %v550 = vpop.f32.mrb[0].mxu0
    %v551 = vadd.f32 0.0, %v550
    %v552 = vpop.f32.mrb[0].mxu0
    %v553 = vpop.f32.mrb[0].mxu0
    %v554 = vadd.f32 0.0, %v553
    %v555 = vpop.f32.mrb[0].mxu0
    %556 = vmatprep.mubr.bf16.mxu0 0
    %557 = vmatmul.mubr.bf16.gmra.mrb[0].mxu0 %v345
    %v558 = vpop.f32.mrb[0].mxu0
    %v559 = vadd.f32 0.0, %v558
    %v560 = vpop.f32.mrb[0].mxu0
    %v561 = vpop.f32.mrb[0].mxu0
    %v562 = vadd.f32 0.0, %v561
    %v563 = vpop.f32.mrb[0].mxu0
    %564 = vmatprep.mubr.bf16.mxu0 0
    %565 = vmatmul.mubr.bf16.gmra.mrb[0].mxu0 %v348
    %v566 = vpop.f32.mrb[0].mxu0
    %v567 = vadd.f32 0.0, %v566
    %v568 = vpop.f32.mrb[0].mxu0
    %v569 = vpop.f32.mrb[0].mxu0
    %v570 = vadd.f32 0.0, %v569
    %v571 = vpop.f32.mrb[0].mxu0
    %572 = vmatprep.mubr.bf16.mxu0 0
    %573 = vmatmul.mubr.bf16.gmra.mrb[0].mxu0 %v351
    %v574 = vpop.f32.mrb[0].mxu0
    %v575 = vadd.f32 0.0, %v574
    %v576 = vpop.f32.mrb[0].mxu0
    %v577 = vpop.f32.mrb[0].mxu0
    %v578 = vadd.f32 0.0, %v577
    %v579 = vpop.f32.mrb[0].mxu0
    %580 = vmatprep.mubr.bf16.mxu0 0
    %581 = vmatmul.mubr.bf16.gmra.mrb[0].mxu0 %v354
    %v582 = vpop.f32.mrb[0].mxu0
    %v583 = vadd.f32 0.0, %v582
    %v584 = vpop.f32.mrb[0].mxu0
    %v585 = vpop.f32.mrb[0].mxu0
    %v586 = vadd.f32 0.0, %v585
    %v587 = vpop.f32.mrb[0].mxu0
    %588 = vmatprep.mubr.bf16.mxu0 0
    %589 = vmatmul.mubr.bf16.gmra.mrb[0].mxu0 %v357
    %v590 = vpop.f32.mrb[0].mxu0
    %v591 = vadd.f32 0.0, %v590
    %v592 = vpop.f32.mrb[0].mxu0
    %v593 = vpop.f32.mrb[0].mxu0
    %v594 = vadd.f32 0.0, %v593
    %v595 = vpop.f32.mrb[0].mxu0
    %596 = vmatprep.mubr.bf16.mxu0 0
    %597 = vmatmul.mubr.bf16.gmra.mrb[0].mxu0 %v360
    %v598 = vpop.f32.mrb[0].mxu0
    %v599 = vadd.f32 0.0, %v598
    %v600 = vpop.f32.mrb[0].mxu0
    %v601 = vpop.f32.mrb[0].mxu0
    %v602 = vadd.f32 0.0, %v601
    %v603 = vpop.f32.mrb[0].mxu0
    %604 = vmatprep.mubr.bf16.mxu0 0
    %605 = vmatmul.mubr.bf16.gmra.mrb[0].mxu0 %v363
    %v606 = vpop.f32.mrb[0].mxu0
    %v607 = vadd.f32 0.0, %v606
    %v608 = vpop.f32.mrb[0].mxu0
    %v609 = vpop.f32.mrb[0].mxu0
    %v610 = vadd.f32 0.0, %v609
    %v611 = vpop.f32.mrb[0].mxu0
    %612 = vmatprep.mubr.bf16.mxu0 0
    %613 = vmatmul.mubr.bf16.gmra.mrb[0].mxu0 %v366
    %v614 = vpop.f32.mrb[0].mxu0
    %v615 = vadd.f32 0.0, %v614
    %v616 = vpop.f32.mrb[0].mxu0
    %v617 = vpop.f32.mrb[0].mxu0
    %v618 = vadd.f32 0.0, %v617
    %v619 = vpop.f32.mrb[0].mxu0
    %620 = vmatprep.mubr.bf16.mxu0 0
    %621 = vmatmul.mubr.bf16.gmra.mrb[0].mxu0 %v369
    %v622 = vpop.f32.mrb[0].mxu0
    %v623 = vadd.f32 0.0, %v622
    %v624 = vpop.f32.mrb[0].mxu0
    %v625 = vpop.f32.mrb[0].mxu0
    %v626 = vadd.f32 0.0, %v625
    %v627 = vpop.f32.mrb[0].mxu0
    %628 = vmatprep.mubr.bf16.mxu0 0
    %629 = vmatmul.mubr.bf16.gmra.mrb[0].mxu0 %v372
    %v630 = vpop.f32.mrb[0].mxu0
    %v631 = vadd.f32 0.0, %v630
    %v632 = vpop.f32.mrb[0].mxu0
    %v633 = vpop.f32.mrb[0].mxu0
    %v634 = vadd.f32 0.0, %v633
    %v635 = vpop.f32.mrb[0].mxu0
    %636 = vmatprep.mubr.bf16.mxu0 0
    %637 = vmatmul.mubr.bf16.gmra.mrb[0].mxu0 %v375
    %v638 = vpop.f32.mrb[0].mxu0
    %v639 = vadd.f32 0.0, %v638
    %v640 = vpop.f32.mrb[0].mxu0
    %v641 = vpop.f32.mrb[0].mxu0
    %v642 = vadd.f32 0.0, %v641
    %v643 = vpop.f32.mrb[0].mxu0
    %644 = vmatprep.mubr.bf16.mxu0 0
    %645 = vmatmul.mubr.bf16.gmra.mrb[0].mxu0 %v378
    %v646 = vpop.f32.mrb[0].mxu0
    %v647 = vadd.f32 0.0, %v646
    %v648 = vpop.f32.mrb[0].mxu0
    %v649 = vpop.f32.mrb[0].mxu0
    %v650 = vadd.f32 0.0, %v649
    %v651 = vpop.f32.mrb[0].mxu0
    %652 = vmatprep.mubr.bf16.mxu0 0
    %653 = vmatmul.mubr.bf16.gmra.mrb[0].mxu0 %v381
    %v654 = vpop.f32.mrb[0].mxu0
    %v655 = vadd.f32 0.0, %v654
    %v656 = vpop.f32.mrb[0].mxu0
    %v657 = vpop.f32.mrb[0].mxu0
    %v658 = vadd.f32 0.0, %v657
    %v659 = vpop.f32.mrb[0].mxu0
    %660 = vmatprep.mubr.bf16.mxu0 0
    %661 = vmatmul.mubr.bf16.gmra.mrb[0].mxu0 %v384
    %v662 = vpop.f32.mrb[0].mxu0
    %v663 = vadd.f32 0.0, %v662
    %v664 = vpop.f32.mrb[0].mxu0
    %v665 = vpop.f32.mrb[0].mxu0
    %v666 = vadd.f32 0.0, %v665
    %v667 = vpop.f32.mrb[0].mxu0
    %668 = vmatprep.mubr.bf16.mxu0 0
    %669 = vmatmul.mubr.bf16.gmra.mrb[0].mxu0 %v387
    %v670 = vpop.f32.mrb[0].mxu0
    %v671 = vadd.f32 0.0, %v670
    %v672 = vpop.f32.mrb[0].mxu0
    %v673 = vpop.f32.mrb[0].mxu0
    %v674 = vadd.f32 0.0, %v673
    %v675 = vpop.f32.mrb[0].mxu0
    %676 = vmatprep.mubr.bf16.mxu0 0
    %677 = vmatmul.mubr.bf16.gmra.mrb[0].mxu0 %v390
    %v678 = vpop.f32.mrb[0].mxu0
    %v679 = vadd.f32 0.0, %v678
    %v680 = vpop.f32.mrb[0].mxu0
    %v681 = vpop.f32.mrb[0].mxu0
    %v682 = vadd.f32 0.0, %v681
    %v683 = vpop.f32.mrb[0].mxu0
    %684 = vdwg.mxu0
    %v693 = vunpack.c.l.b16 %v45
    %v694 = vunpack.c.l.b16 %v55
    %v695 = vunpack.c.l.b16 %v65
    %v696 = vunpack.c.l.b16 %v75
    %v697 = vunpack.c.l.b16 %v85
    %v698 = vunpack.c.l.b16 %v95
    %v699 = vunpack.c.l.b16 %v105
    %v700 = vunpack.c.l.b16 %v115
    %v701 = vpack.c.b16 %v194, %v693
    %v702 = vpack.c.b16 %v196, %v195
    %v703 = vpack.c.b16 %v198, %v197
    %v704 = vpack.c.b16 %v200, %v199
    %v705 = vpack.c.b16 %v202, %v694
    %v706 = vpack.c.b16 %v204, %v203
    %v707 = vpack.c.b16 %v206, %v205
    %v708 = vpack.c.b16 %v208, %v207
    %v709 = vpack.c.b16 %v210, %v695
    %v710 = vpack.c.b16 %v212, %v211
    %v711 = vpack.c.b16 %v214, %v213
    %v712 = vpack.c.b16 %v216, %v215
    %v713 = vpack.c.b16 %v218, %v696
    %v714 = vpack.c.b16 %v220, %v219
    %v715 = vpack.c.b16 %v222, %v221
    %v716 = vpack.c.b16 %v224, %v223
    %v717 = vpack.c.b16 %v226, %v697
    %v718 = vpack.c.b16 %v228, %v227
    %v719 = vpack.c.b16 %v230, %v229
    %v720 = vpack.c.b16 %v232, %v231
    %v721 = vpack.c.b16 %v234, %v698
    %v722 = vpack.c.b16 %v236, %v235
    %v723 = vpack.c.b16 %v238, %v237
    %v724 = vpack.c.b16 %v240, %v239
    %v725 = vpack.c.b16 %v242, %v699
    %v726 = vpack.c.b16 %v244, %v243
    %v727 = vpack.c.b16 %v246, %v245
    %v728 = vpack.c.b16 %v248, %v247
    %v729 = vpack.c.b16 %v250, %v700
    %v730 = vpack.c.b16 %v252, %v251
    %v731 = vpack.c.b16 %v254, %v253
    %v732 = vpack.c.b16 %v256, %v255
    %v735 = vunpack.c.l.b16 %v125
    %v736 = vunpack.c.l.b16 %v126
    %v737 = vpack.c.b16 %v736, %v735
    %v739 = vsel %vm295, %v701, 0
    %v742 = vsel %vm295, %v702, 0
    %v745 = vsel %vm295, %v703, 0
    %v748 = vsel %vm295, %v704, 0
    %v751 = vsel %vm295, %v705, 0
    %v754 = vsel %vm295, %v706, 0
    %v757 = vsel %vm295, %v707, 0
    %v760 = vsel %vm295, %v708, 0
    %v763 = vsel %vm295, %v709, 0
    %v766 = vsel %vm295, %v710, 0
    %v769 = vsel %vm295, %v711, 0
    %v772 = vsel %vm295, %v712, 0
    %v775 = vsel %vm295, %v713, 0
    %v778 = vsel %vm295, %v714, 0
    %v781 = vsel %vm295, %v715, 0
    %v784 = vsel %vm295, %v716, 0
    %v787 = vsel %vm295, %v717, 0
    %v790 = vsel %vm295, %v718, 0
    %v793 = vsel %vm295, %v719, 0
    %v796 = vsel %vm295, %v720, 0
    %v799 = vsel %vm295, %v721, 0
    %v802 = vsel %vm295, %v722, 0
    %v805 = vsel %vm295, %v723, 0
    %v808 = vsel %vm295, %v724, 0
    %v811 = vsel %vm295, %v725, 0
    %v814 = vsel %vm295, %v726, 0
    %v817 = vsel %vm295, %v727, 0
    %v820 = vsel %vm295, %v728, 0
    %v823 = vsel %vm295, %v729, 0
    %v826 = vsel %vm295, %v730, 0
    %v829 = vsel %vm295, %v731, 0
    %v832 = vsel %vm295, %v732, 0
    %v835 = vsel %vm392, %v737, 0
    %837 = vmatprep.subr.bf16.mxu0 0
    %838 = vmatpush1.bf16.msra.mxu0 %v835
    %839 = vmatprep.subr.bf16.mxu0 0
    %840 = vmatpush1.bf16.msra.mxu0 0
    %841 = vmatprep.subr.bf16.mxu0 0
    %842 = vmatpush1.bf16.msra.mxu0 0
    %843 = vmatprep.subr.bf16.mxu0 0
    %844 = vmatpush1.bf16.msra.mxu0 0
    %845 = vmatprep.subr.bf16.mxu0 0
    %846 = vmatpush1.bf16.msra.mxu0 0
    %847 = vmatprep.subr.bf16.mxu0 0
    %848 = vmatpush1.bf16.msra.mxu0 0
    %849 = vmatprep.subr.bf16.mxu0 0
    %850 = vmatpush1.bf16.msra.mxu0 0
    %851 = vmatprep.subr.bf16.mxu0 0
    %852 = vmatpush1.bf16.msra.mxu0 0
    %853 = vmatprep.subr.bf16.mxu0 0
    %854 = vmatpush1.bf16.msra.mxu0 0
    %855 = vmatprep.subr.bf16.mxu0 0
    %856 = vmatpush1.bf16.msra.mxu0 0
    %857 = vmatprep.subr.bf16.mxu0 0
    %858 = vmatpush1.bf16.msra.mxu0 0
    %859 = vmatprep.subr.bf16.mxu0 0
    %860 = vmatpush1.bf16.msra.mxu0 0
    %861 = vmatprep.subr.bf16.mxu0 0
    %862 = vmatpush1.bf16.msra.mxu0 0
    %863 = vmatprep.subr.bf16.mxu0 0
    %864 = vmatpush1.bf16.msra.mxu0 0
    %865 = vmatprep.subr.bf16.mxu0 0
    %866 = vmatpush1.bf16.msra.mxu0 0
    %867 = vmatprep.subr.bf16.mxu0 0
    %868 = vmatpush1.bf16.msra.mxu0 0
    %869 = vmatprep.mubr.bf16.mxu0 0
    %870 = vmatmul.mubr.bf16.gmra.mrb[0].mxu0 %v739
    %v871 = vpop.f32.mrb[0].mxu0
    %v872 = vadd.f32 %v431, %v871
    %v873 = vpop.f32.mrb[0].mxu0
    %v874 = vpop.f32.mrb[0].mxu0
    %v875 = vadd.f32 %v434, %v874
    %v876 = vpop.f32.mrb[0].mxu0
    %877 = vmatprep.mubr.bf16.mxu0 0
    %878 = vmatmul.mubr.bf16.gmra.mrb[0].mxu0 %v742
    %v879 = vpop.f32.mrb[0].mxu0
    %v880 = vadd.f32 %v439, %v879
    %v881 = vpop.f32.mrb[0].mxu0
    %v882 = vpop.f32.mrb[0].mxu0
    %v883 = vadd.f32 %v442, %v882
    %v884 = vpop.f32.mrb[0].mxu0
    %885 = vmatprep.mubr.bf16.mxu0 0
    %886 = vmatmul.mubr.bf16.gmra.mrb[0].mxu0 %v745
    %v887 = vpop.f32.mrb[0].mxu0
    %v888 = vadd.f32 %v447, %v887
    %v889 = vpop.f32.mrb[0].mxu0
    %v890 = vpop.f32.mrb[0].mxu0
    %v891 = vadd.f32 %v450, %v890
    %v892 = vpop.f32.mrb[0].mxu0
    %893 = vmatprep.mubr.bf16.mxu0 0
    %894 = vmatmul.mubr.bf16.gmra.mrb[0].mxu0 %v748
    %v895 = vpop.f32.mrb[0].mxu0
    %v896 = vadd.f32 %v455, %v895
    %v897 = vpop.f32.mrb[0].mxu0
    %v898 = vpop.f32.mrb[0].mxu0
    %v899 = vadd.f32 %v458, %v898
    %v900 = vpop.f32.mrb[0].mxu0
    %901 = vmatprep.mubr.bf16.mxu0 0
    %902 = vmatmul.mubr.bf16.gmra.mrb[0].mxu0 %v751
    %v903 = vpop.f32.mrb[0].mxu0
    %v904 = vadd.f32 %v463, %v903
    %v905 = vpop.f32.mrb[0].mxu0
    %v906 = vpop.f32.mrb[0].mxu0
    %v907 = vadd.f32 %v466, %v906
    %v908 = vpop.f32.mrb[0].mxu0
    %909 = vmatprep.mubr.bf16.mxu0 0
    %910 = vmatmul.mubr.bf16.gmra.mrb[0].mxu0 %v754
    %v911 = vpop.f32.mrb[0].mxu0
    %v912 = vadd.f32 %v471, %v911
    %v913 = vpop.f32.mrb[0].mxu0
    %v914 = vpop.f32.mrb[0].mxu0
    %v915 = vadd.f32 %v474, %v914
    %v916 = vpop.f32.mrb[0].mxu0
    %917 = vmatprep.mubr.bf16.mxu0 0
    %918 = vmatmul.mubr.bf16.gmra.mrb[0].mxu0 %v757
    %v919 = vpop.f32.mrb[0].mxu0
    %v920 = vadd.f32 %v479, %v919
    %v921 = vpop.f32.mrb[0].mxu0
    %v922 = vpop.f32.mrb[0].mxu0
    %v923 = vadd.f32 %v482, %v922
    %v924 = vpop.f32.mrb[0].mxu0
    %925 = vmatprep.mubr.bf16.mxu0 0
    %926 = vmatmul.mubr.bf16.gmra.mrb[0].mxu0 %v760
    %v927 = vpop.f32.mrb[0].mxu0
    %v928 = vadd.f32 %v487, %v927
    %v929 = vpop.f32.mrb[0].mxu0
    %v930 = vpop.f32.mrb[0].mxu0
    %v931 = vadd.f32 %v490, %v930
    %v932 = vpop.f32.mrb[0].mxu0
    %933 = vmatprep.mubr.bf16.mxu0 0
    %934 = vmatmul.mubr.bf16.gmra.mrb[0].mxu0 %v763
    %v935 = vpop.f32.mrb[0].mxu0
    %v936 = vadd.f32 %v495, %v935
    %v937 = vpop.f32.mrb[0].mxu0
    %v938 = vpop.f32.mrb[0].mxu0
    %v939 = vadd.f32 %v498, %v938
    %v940 = vpop.f32.mrb[0].mxu0
    %941 = vmatprep.mubr.bf16.mxu0 0
    %942 = vmatmul.mubr.bf16.gmra.mrb[0].mxu0 %v766
    %v943 = vpop.f32.mrb[0].mxu0
    %v944 = vadd.f32 %v503, %v943
    %v945 = vpop.f32.mrb[0].mxu0
    %v946 = vpop.f32.mrb[0].mxu0
    %v947 = vadd.f32 %v506, %v946
    %v948 = vpop.f32.mrb[0].mxu0
    %949 = vmatprep.mubr.bf16.mxu0 0
    %950 = vmatmul.mubr.bf16.gmra.mrb[0].mxu0 %v769
    %v951 = vpop.f32.mrb[0].mxu0
    %v952 = vadd.f32 %v511, %v951
    %v953 = vpop.f32.mrb[0].mxu0
    %v954 = vpop.f32.mrb[0].mxu0
    %v955 = vadd.f32 %v514, %v954
    %v956 = vpop.f32.mrb[0].mxu0
    %957 = vmatprep.mubr.bf16.mxu0 0
    %958 = vmatmul.mubr.bf16.gmra.mrb[0].mxu0 %v772
    %v959 = vpop.f32.mrb[0].mxu0
    %v960 = vadd.f32 %v519, %v959
    %v961 = vpop.f32.mrb[0].mxu0
    %v962 = vpop.f32.mrb[0].mxu0
    %v963 = vadd.f32 %v522, %v962
    %v964 = vpop.f32.mrb[0].mxu0
    %965 = vmatprep.mubr.bf16.mxu0 0
    %966 = vmatmul.mubr.bf16.gmra.mrb[0].mxu0 %v775
    %v967 = vpop.f32.mrb[0].mxu0
    %v968 = vadd.f32 %v527, %v967
    %v969 = vpop.f32.mrb[0].mxu0
    %v970 = vpop.f32.mrb[0].mxu0
    %v971 = vadd.f32 %v530, %v970
    %v972 = vpop.f32.mrb[0].mxu0
    %973 = vmatprep.mubr.bf16.mxu0 0
    %974 = vmatmul.mubr.bf16.gmra.mrb[0].mxu0 %v778
    %v975 = vpop.f32.mrb[0].mxu0
    %v976 = vadd.f32 %v535, %v975
    %v977 = vpop.f32.mrb[0].mxu0
    %v978 = vpop.f32.mrb[0].mxu0
    %v979 = vadd.f32 %v538, %v978
    %v980 = vpop.f32.mrb[0].mxu0
    %981 = vmatprep.mubr.bf16.mxu0 0
    %982 = vmatmul.mubr.bf16.gmra.mrb[0].mxu0 %v781
    %v983 = vpop.f32.mrb[0].mxu0
    %v984 = vadd.f32 %v543, %v983
    %v985 = vpop.f32.mrb[0].mxu0
    %v986 = vpop.f32.mrb[0].mxu0
    %v987 = vadd.f32 %v546, %v986
    %v988 = vpop.f32.mrb[0].mxu0
    %989 = vmatprep.mubr.bf16.mxu0 0
    %990 = vmatmul.mubr.bf16.gmra.mrb[0].mxu0 %v784
    %v991 = vpop.f32.mrb[0].mxu0
    %v992 = vadd.f32 %v551, %v991
    %v993 = vpop.f32.mrb[0].mxu0
    %v994 = vpop.f32.mrb[0].mxu0
    %v995 = vadd.f32 %v554, %v994
    %v996 = vpop.f32.mrb[0].mxu0
    %997 = vmatprep.mubr.bf16.mxu0 0
    %998 = vmatmul.mubr.bf16.gmra.mrb[0].mxu0 %v787
    %v999 = vpop.f32.mrb[0].mxu0
    %v1000 = vadd.f32 %v559, %v999
    %v1001 = vpop.f32.mrb[0].mxu0
    %v1002 = vpop.f32.mrb[0].mxu0
    %v1003 = vadd.f32 %v562, %v1002
    %v1004 = vpop.f32.mrb[0].mxu0
    %1005 = vmatprep.mubr.bf16.mxu0 0
    %1006 = vmatmul.mubr.bf16.gmra.mrb[0].mxu0 %v790
    %v1007 = vpop.f32.mrb[0].mxu0
    %v1008 = vadd.f32 %v567, %v1007
    %v1009 = vpop.f32.mrb[0].mxu0
    %v1010 = vpop.f32.mrb[0].mxu0
    %v1011 = vadd.f32 %v570, %v1010
    %v1012 = vpop.f32.mrb[0].mxu0
    %1013 = vmatprep.mubr.bf16.mxu0 0
    %1014 = vmatmul.mubr.bf16.gmra.mrb[0].mxu0 %v793
    %v1015 = vpop.f32.mrb[0].mxu0
    %v1016 = vadd.f32 %v575, %v1015
    %v1017 = vpop.f32.mrb[0].mxu0
    %v1018 = vpop.f32.mrb[0].mxu0
    %v1019 = vadd.f32 %v578, %v1018
    %v1020 = vpop.f32.mrb[0].mxu0
    %1021 = vmatprep.mubr.bf16.mxu0 0
    %1022 = vmatmul.mubr.bf16.gmra.mrb[0].mxu0 %v796
    %v1023 = vpop.f32.mrb[0].mxu0
    %v1024 = vadd.f32 %v583, %v1023
    %v1025 = vpop.f32.mrb[0].mxu0
    %v1026 = vpop.f32.mrb[0].mxu0
    %v1027 = vadd.f32 %v586, %v1026
    %v1028 = vpop.f32.mrb[0].mxu0
    %1029 = vmatprep.mubr.bf16.mxu0 0
    %1030 = vmatmul.mubr.bf16.gmra.mrb[0].mxu0 %v799
    %v1031 = vpop.f32.mrb[0].mxu0
    %v1032 = vadd.f32 %v591, %v1031
    %v1033 = vpop.f32.mrb[0].mxu0
    %v1034 = vpop.f32.mrb[0].mxu0
    %v1035 = vadd.f32 %v594, %v1034
    %v1036 = vpop.f32.mrb[0].mxu0
    %1037 = vmatprep.mubr.bf16.mxu0 0
    %1038 = vmatmul.mubr.bf16.gmra.mrb[0].mxu0 %v802
    %v1039 = vpop.f32.mrb[0].mxu0
    %v1040 = vadd.f32 %v599, %v1039
    %v1041 = vpop.f32.mrb[0].mxu0
    %v1042 = vpop.f32.mrb[0].mxu0
    %v1043 = vadd.f32 %v602, %v1042
    %v1044 = vpop.f32.mrb[0].mxu0
    %1045 = vmatprep.mubr.bf16.mxu0 0
    %1046 = vmatmul.mubr.bf16.gmra.mrb[0].mxu0 %v805
    %v1047 = vpop.f32.mrb[0].mxu0
    %v1048 = vadd.f32 %v607, %v1047
    %v1049 = vpop.f32.mrb[0].mxu0
    %v1050 = vpop.f32.mrb[0].mxu0
    %v1051 = vadd.f32 %v610, %v1050
    %v1052 = vpop.f32.mrb[0].mxu0
    %1053 = vmatprep.mubr.bf16.mxu0 0
    %1054 = vmatmul.mubr.bf16.gmra.mrb[0].mxu0 %v808
    %v1055 = vpop.f32.mrb[0].mxu0
    %v1056 = vadd.f32 %v615, %v1055
    %v1057 = vpop.f32.mrb[0].mxu0
    %v1058 = vpop.f32.mrb[0].mxu0
    %v1059 = vadd.f32 %v618, %v1058
    %v1060 = vpop.f32.mrb[0].mxu0
    %1061 = vmatprep.mubr.bf16.mxu0 0
    %1062 = vmatmul.mubr.bf16.gmra.mrb[0].mxu0 %v811
    %v1063 = vpop.f32.mrb[0].mxu0
    %v1064 = vadd.f32 %v623, %v1063
    %v1065 = vpop.f32.mrb[0].mxu0
    %v1066 = vpop.f32.mrb[0].mxu0
    %v1067 = vadd.f32 %v626, %v1066
    %v1068 = vpop.f32.mrb[0].mxu0
    %1069 = vmatprep.mubr.bf16.mxu0 0
    %1070 = vmatmul.mubr.bf16.gmra.mrb[0].mxu0 %v814
    %v1071 = vpop.f32.mrb[0].mxu0
    %v1072 = vadd.f32 %v631, %v1071
    %v1073 = vpop.f32.mrb[0].mxu0
    %v1074 = vpop.f32.mrb[0].mxu0
    %v1075 = vadd.f32 %v634, %v1074
    %v1076 = vpop.f32.mrb[0].mxu0
    %1077 = vmatprep.mubr.bf16.mxu0 0
    %1078 = vmatmul.mubr.bf16.gmra.mrb[0].mxu0 %v817
    %v1079 = vpop.f32.mrb[0].mxu0
    %v1080 = vadd.f32 %v639, %v1079
    %v1081 = vpop.f32.mrb[0].mxu0
    %v1082 = vpop.f32.mrb[0].mxu0
    %v1083 = vadd.f32 %v642, %v1082
    %v1084 = vpop.f32.mrb[0].mxu0
    %1085 = vmatprep.mubr.bf16.mxu0 0
    %1086 = vmatmul.mubr.bf16.gmra.mrb[0].mxu0 %v820
    %v1087 = vpop.f32.mrb[0].mxu0
    %v1088 = vadd.f32 %v647, %v1087
    %v1089 = vpop.f32.mrb[0].mxu0
    %v1090 = vpop.f32.mrb[0].mxu0
    %v1091 = vadd.f32 %v650, %v1090
    %v1092 = vpop.f32.mrb[0].mxu0
    %1093 = vmatprep.mubr.bf16.mxu0 0
    %1094 = vmatmul.mubr.bf16.gmra.mrb[0].mxu0 %v823
    %v1095 = vpop.f32.mrb[0].mxu0
    %v1096 = vadd.f32 %v655, %v1095
    %v1097 = vpop.f32.mrb[0].mxu0
    %v1098 = vpop.f32.mrb[0].mxu0
    %v1099 = vadd.f32 %v658, %v1098
    %v1100 = vpop.f32.mrb[0].mxu0
    %1101 = vmatprep.mubr.bf16.mxu0 0
    %1102 = vmatmul.mubr.bf16.gmra.mrb[0].mxu0 %v826
    %v1103 = vpop.f32.mrb[0].mxu0
    %v1104 = vadd.f32 %v663, %v1103
    %v1105 = vpop.f32.mrb[0].mxu0
    %v1106 = vpop.f32.mrb[0].mxu0
    %v1107 = vadd.f32 %v666, %v1106
    %v1108 = vpop.f32.mrb[0].mxu0
    %1109 = vmatprep.mubr.bf16.mxu0 0
    %1110 = vmatmul.mubr.bf16.gmra.mrb[0].mxu0 %v829
    %v1111 = vpop.f32.mrb[0].mxu0
    %v1112 = vadd.f32 %v671, %v1111
    %v1113 = vpop.f32.mrb[0].mxu0
    %v1114 = vpop.f32.mrb[0].mxu0
    %v1115 = vadd.f32 %v674, %v1114
    %v1116 = vpop.f32.mrb[0].mxu0
    %1117 = vmatprep.mubr.bf16.mxu0 0
    %1118 = vmatmul.mubr.bf16.gmra.mrb[0].mxu0 %v832
    %v1119 = vpop.f32.mrb[0].mxu0
    %v1120 = vadd.f32 %v679, %v1119
    %v1121 = vpop.f32.mrb[0].mxu0
    %v1122 = vpop.f32.mrb[0].mxu0
    %v1123 = vadd.f32 %v682, %v1122
    %v1124 = vpop.f32.mrb[0].mxu0
    %1125 = vdwg.mxu0
    %s1126 = scalar_lea.vmem [#allocation5], 16
    %v1127 = vld [vmem:[%s1126] sm:$0xf]
    %v1128 = vld [vmem:[%s1126 + $0x4] sm:$0x3]
    %v1137 = vunpack.c.l.b16 %v54
    %v1138 = vunpack.c.l.b16 %v64
    %v1139 = vunpack.c.l.b16 %v74
    %v1140 = vunpack.c.l.b16 %v84
    %v1141 = vunpack.c.l.b16 %v94
    %v1142 = vunpack.c.l.b16 %v104
    %v1143 = vunpack.c.l.b16 %v114
    %v1144 = vunpack.c.l.b16 %v124
    %v1145 = vpack.c.b16 %v1137, %v201
    %v1146 = vpack.c.b16 %v1138, %v209
    %v1147 = vpack.c.b16 %v1139, %v217
    %v1148 = vpack.c.b16 %v1140, %v225
    %v1149 = vpack.c.b16 %v1141, %v233
    %v1150 = vpack.c.b16 %v1142, %v241
    %v1151 = vpack.c.b16 %v1143, %v249
    %v1152 = vpack.c.b16 %v1144, %v257
    %v1155 = vunpack.c.l.b16 %v1127
    %v1156 = vunpack.c.l.b16 %v1128
    %v1157 = vpack.c.b16 %v1156, %v1155
    %v1159 = vsel %vm295, %v1145, 0
    %v1162 = vsel %vm295, %v1146, 0
    %v1165 = vsel %vm295, %v1147, 0
    %v1168 = vsel %vm295, %v1148, 0
    %v1171 = vsel %vm295, %v1149, 0
    %v1174 = vsel %vm295, %v1150, 0
    %v1177 = vsel %vm295, %v1151, 0
    %v1180 = vsel %vm295, %v1152, 0
    %v1183 = vsel %vm392, %v1157, 0
    %1185 = vmatprep.subr.bf16.mxu0 0
    %1186 = vmatpush1.bf16.msra.mxu0 %v1183
    %1187 = vmatprep.subr.bf16.mxu0 0
    %1188 = vmatpush1.bf16.msra.mxu0 0
    %1189 = vmatprep.subr.bf16.mxu0 0
    %1190 = vmatpush1.bf16.msra.mxu0 0
    %1191 = vmatprep.subr.bf16.mxu0 0
    %1192 = vmatpush1.bf16.msra.mxu0 0
    %1193 = vmatprep.subr.bf16.mxu0 0
    %1194 = vmatpush1.bf16.msra.mxu0 0
    %1195 = vmatprep.subr.bf16.mxu0 0
    %1196 = vmatpush1.bf16.msra.mxu0 0
    %1197 = vmatprep.subr.bf16.mxu0 0
    %1198 = vmatpush1.bf16.msra.mxu0 0
    %1199 = vmatprep.subr.bf16.mxu0 0
    %1200 = vmatpush1.bf16.msra.mxu0 0
    %1201 = vmatprep.subr.bf16.mxu0 0
    %1202 = vmatpush1.bf16.msra.mxu0 0
    %1203 = vmatprep.subr.bf16.mxu0 0
    %1204 = vmatpush1.bf16.msra.mxu0 0
    %1205 = vmatprep.subr.bf16.mxu0 0
    %1206 = vmatpush1.bf16.msra.mxu0 0
    %1207 = vmatprep.subr.bf16.mxu0 0
    %1208 = vmatpush1.bf16.msra.mxu0 0
    %1209 = vmatprep.subr.bf16.mxu0 0
    %1210 = vmatpush1.bf16.msra.mxu0 0
    %1211 = vmatprep.subr.bf16.mxu0 0
    %1212 = vmatpush1.bf16.msra.mxu0 0
    %1213 = vmatprep.subr.bf16.mxu0 0
    %1214 = vmatpush1.bf16.msra.mxu0 0
    %1215 = vmatprep.subr.bf16.mxu0 0
    %1216 = vmatpush1.bf16.msra.mxu0 0
    %1217 = vmatprep.mubr.bf16.mxu0 0
    %1218 = vmatmul.mubr.bf16.gmra.mrb[0].mxu0 %v742
    %v1219 = vpop.f32.mrb[0].mxu0
    %v1220 = vadd.f32 0.0, %v1219
    %v1221 = vpop.f32.mrb[0].mxu0
    %v1222 = vpop.f32.mrb[0].mxu0
    %v1223 = vadd.f32 0.0, %v1222
    %v1224 = vpop.f32.mrb[0].mxu0
    %1225 = vmatprep.mubr.bf16.mxu0 0
    %1226 = vmatmul.mubr.bf16.gmra.mrb[0].mxu0 %v745
    %v1227 = vpop.f32.mrb[0].mxu0
    %v1228 = vadd.f32 0.0, %v1227
    %v1229 = vpop.f32.mrb[0].mxu0
    %v1230 = vpop.f32.mrb[0].mxu0
    %v1231 = vadd.f32 0.0, %v1230
    %v1232 = vpop.f32.mrb[0].mxu0
    %1233 = vmatprep.mubr.bf16.mxu0 0
    %1234 = vmatmul.mubr.bf16.gmra.mrb[0].mxu0 %v748
    %v1235 = vpop.f32.mrb[0].mxu0
    %v1236 = vadd.f32 0.0, %v1235
    %v1237 = vpop.f32.mrb[0].mxu0
    %v1238 = vpop.f32.mrb[0].mxu0
    %v1239 = vadd.f32 0.0, %v1238
    %v1240 = vpop.f32.mrb[0].mxu0
    %1241 = vmatprep.mubr.bf16.mxu0 0
    %1242 = vmatmul.mubr.bf16.gmra.mrb[0].mxu0 %v1159
    %v1243 = vpop.f32.mrb[0].mxu0
    %v1244 = vadd.f32 0.0, %v1243
    %v1245 = vpop.f32.mrb[0].mxu0
    %v1246 = vpop.f32.mrb[0].mxu0
    %v1247 = vadd.f32 0.0, %v1246
    %v1248 = vpop.f32.mrb[0].mxu0
    %1249 = vmatprep.mubr.bf16.mxu0 0
    %1250 = vmatmul.mubr.bf16.gmra.mrb[0].mxu0 %v754
    %v1251 = vpop.f32.mrb[0].mxu0
    %v1252 = vadd.f32 0.0, %v1251
    %v1253 = vpop.f32.mrb[0].mxu0
    %v1254 = vpop.f32.mrb[0].mxu0
    %v1255 = vadd.f32 0.0, %v1254
    %v1256 = vpop.f32.mrb[0].mxu0
    %1257 = vmatprep.mubr.bf16.mxu0 0
    %1258 = vmatmul.mubr.bf16.gmra.mrb[0].mxu0 %v757
    %v1259 = vpop.f32.mrb[0].mxu0
    %v1260 = vadd.f32 0.0, %v1259
    %v1261 = vpop.f32.mrb[0].mxu0
    %v1262 = vpop.f32.mrb[0].mxu0
    %v1263 = vadd.f32 0.0, %v1262
    %v1264 = vpop.f32.mrb[0].mxu0
    %1265 = vmatprep.mubr.bf16.mxu0 0
    %1266 = vmatmul.mubr.bf16.gmra.mrb[0].mxu0 %v760
    %v1267 = vpop.f32.mrb[0].mxu0
    %v1268 = vadd.f32 0.0, %v1267
    %v1269 = vpop.f32.mrb[0].mxu0
    %v1270 = vpop.f32.mrb[0].mxu0
    %v1271 = vadd.f32 0.0, %v1270
    %v1272 = vpop.f32.mrb[0].mxu0
    %1273 = vmatprep.mubr.bf16.mxu0 0
    %1274 = vmatmul.mubr.bf16.gmra.mrb[0].mxu0 %v1162
    %v1275 = vpop.f32.mrb[0].mxu0
    %v1276 = vadd.f32 0.0, %v1275
    %v1277 = vpop.f32.mrb[0].mxu0
    %v1278 = vpop.f32.mrb[0].mxu0
    %v1279 = vadd.f32 0.0, %v1278
    %v1280 = vpop.f32.mrb[0].mxu0
    %1281 = vmatprep.mubr.bf16.mxu0 0
    %1282 = vmatmul.mubr.bf16.gmra.mrb[0].mxu0 %v766
    %v1283 = vpop.f32.mrb[0].mxu0
    %v1284 = vadd.f32 0.0, %v1283
    %v1285 = vpop.f32.mrb[0].mxu0
    %v1286 = vpop.f32.mrb[0].mxu0
    %v1287 = vadd.f32 0.0, %v1286
    %v1288 = vpop.f32.mrb[0].mxu0
    %1289 = vmatprep.mubr.bf16.mxu0 0
    %1290 = vmatmul.mubr.bf16.gmra.mrb[0].mxu0 %v769
    %v1291 = vpop.f32.mrb[0].mxu0
    %v1292 = vadd.f32 0.0, %v1291
    %v1293 = vpop.f32.mrb[0].mxu0
    %v1294 = vpop.f32.mrb[0].mxu0
    %v1295 = vadd.f32 0.0, %v1294
    %v1296 = vpop.f32.mrb[0].mxu0
    %1297 = vmatprep.mubr.bf16.mxu0 0
    %1298 = vmatmul.mubr.bf16.gmra.mrb[0].mxu0 %v772
    %v1299 = vpop.f32.mrb[0].mxu0
    %v1300 = vadd.f32 0.0, %v1299
    %v1301 = vpop.f32.mrb[0].mxu0
    %v1302 = vpop.f32.mrb[0].mxu0
    %v1303 = vadd.f32 0.0, %v1302
    %v1304 = vpop.f32.mrb[0].mxu0
    %1305 = vmatprep.mubr.bf16.mxu0 0
    %1306 = vmatmul.mubr.bf16.gmra.mrb[0].mxu0 %v1165
    %v1307 = vpop.f32.mrb[0].mxu0
    %v1308 = vadd.f32 0.0, %v1307
    %v1309 = vpop.f32.mrb[0].mxu0
    %v1310 = vpop.f32.mrb[0].mxu0
    %v1311 = vadd.f32 0.0, %v1310
    %v1312 = vpop.f32.mrb[0].mxu0
    %1313 = vmatprep.mubr.bf16.mxu0 0
    %1314 = vmatmul.mubr.bf16.gmra.mrb[0].mxu0 %v778
    %v1315 = vpop.f32.mrb[0].mxu0
    %v1316 = vadd.f32 0.0, %v1315
    %v1317 = vpop.f32.mrb[0].mxu0
    %v1318 = vpop.f32.mrb[0].mxu0
    %v1319 = vadd.f32 0.0, %v1318
    %v1320 = vpop.f32.mrb[0].mxu0
    %1321 = vmatprep.mubr.bf16.mxu0 0
    %1322 = vmatmul.mubr.bf16.gmra.mrb[0].mxu0 %v781
    %v1323 = vpop.f32.mrb[0].mxu0
    %v1324 = vadd.f32 0.0, %v1323
    %v1325 = vpop.f32.mrb[0].mxu0
    %v1326 = vpop.f32.mrb[0].mxu0
    %v1327 = vadd.f32 0.0, %v1326
    %v1328 = vpop.f32.mrb[0].mxu0
    %1329 = vmatprep.mubr.bf16.mxu0 0
    %1330 = vmatmul.mubr.bf16.gmra.mrb[0].mxu0 %v784
    %v1331 = vpop.f32.mrb[0].mxu0
    %v1332 = vadd.f32 0.0, %v1331
    %v1333 = vpop.f32.mrb[0].mxu0
    %v1334 = vpop.f32.mrb[0].mxu0
    %v1335 = vadd.f32 0.0, %v1334
    %v1336 = vpop.f32.mrb[0].mxu0
    %1337 = vmatprep.mubr.bf16.mxu0 0
    %1338 = vmatmul.mubr.bf16.gmra.mrb[0].mxu0 %v1168
    %v1339 = vpop.f32.mrb[0].mxu0
    %v1340 = vadd.f32 0.0, %v1339
    %v1341 = vpop.f32.mrb[0].mxu0
    %v1342 = vpop.f32.mrb[0].mxu0
    %v1343 = vadd.f32 0.0, %v1342
    %v1344 = vpop.f32.mrb[0].mxu0
    %1345 = vmatprep.mubr.bf16.mxu0 0
    %1346 = vmatmul.mubr.bf16.gmra.mrb[0].mxu0 %v790
    %v1347 = vpop.f32.mrb[0].mxu0
    %v1348 = vadd.f32 0.0, %v1347
    %v1349 = vpop.f32.mrb[0].mxu0
    %v1350 = vpop.f32.mrb[0].mxu0
    %v1351 = vadd.f32 0.0, %v1350
    %v1352 = vpop.f32.mrb[0].mxu0
    %1353 = vmatprep.mubr.bf16.mxu0 0
    %1354 = vmatmul.mubr.bf16.gmra.mrb[0].mxu0 %v793
    %v1355 = vpop.f32.mrb[0].mxu0
    %v1356 = vadd.f32 0.0, %v1355
    %v1357 = vpop.f32.mrb[0].mxu0
    %v1358 = vpop.f32.mrb[0].mxu0
    %v1359 = vadd.f32 0.0, %v1358
    %v1360 = vpop.f32.mrb[0].mxu0
    %1361 = vmatprep.mubr.bf16.mxu0 0
    %1362 = vmatmul.mubr.bf16.gmra.mrb[0].mxu0 %v796
    %v1363 = vpop.f32.mrb[0].mxu0
    %v1364 = vadd.f32 0.0, %v1363
    %v1365 = vpop.f32.mrb[0].mxu0
    %v1366 = vpop.f32.mrb[0].mxu0
    %v1367 = vadd.f32 0.0, %v1366
    %v1368 = vpop.f32.mrb[0].mxu0
    %1369 = vmatprep.mubr.bf16.mxu0 0
    %1370 = vmatmul.mubr.bf16.gmra.mrb[0].mxu0 %v1171
    %v1371 = vpop.f32.mrb[0].mxu0
    %v1372 = vadd.f32 0.0, %v1371
    %v1373 = vpop.f32.mrb[0].mxu0
    %v1374 = vpop.f32.mrb[0].mxu0
    %v1375 = vadd.f32 0.0, %v1374
    %v1376 = vpop.f32.mrb[0].mxu0
    %1377 = vmatprep.mubr.bf16.mxu0 0
    %1378 = vmatmul.mubr.bf16.gmra.mrb[0].mxu0 %v802
    %v1379 = vpop.f32.mrb[0].mxu0
    %v1380 = vadd.f32 0.0, %v1379
    %v1381 = vpop.f32.mrb[0].mxu0
    %v1382 = vpop.f32.mrb[0].mxu0
    %v1383 = vadd.f32 0.0, %v1382
    %v1384 = vpop.f32.mrb[0].mxu0
    %1385 = vmatprep.mubr.bf16.mxu0 0
    %1386 = vmatmul.mubr.bf16.gmra.mrb[0].mxu0 %v805
    %v1387 = vpop.f32.mrb[0].mxu0
    %v1388 = vadd.f32 0.0, %v1387
    %v1389 = vpop.f32.mrb[0].mxu0
    %v1390 = vpop.f32.mrb[0].mxu0
    %v1391 = vadd.f32 0.0, %v1390
    %v1392 = vpop.f32.mrb[0].mxu0
    %1393 = vmatprep.mubr.bf16.mxu0 0
    %1394 = vmatmul.mubr.bf16.gmra.mrb[0].mxu0 %v808
    %v1395 = vpop.f32.mrb[0].mxu0
    %v1396 = vadd.f32 0.0, %v1395
    %v1397 = vpop.f32.mrb[0].mxu0
    %v1398 = vpop.f32.mrb[0].mxu0
    %v1399 = vadd.f32 0.0, %v1398
    %v1400 = vpop.f32.mrb[0].mxu0
    %1401 = vmatprep.mubr.bf16.mxu0 0
    %1402 = vmatmul.mubr.bf16.gmra.mrb[0].mxu0 %v1174
    %v1403 = vpop.f32.mrb[0].mxu0
    %v1404 = vadd.f32 0.0, %v1403
    %v1405 = vpop.f32.mrb[0].mxu0
    %v1406 = vpop.f32.mrb[0].mxu0
    %v1407 = vadd.f32 0.0, %v1406
    %v1408 = vpop.f32.mrb[0].mxu0
    %1409 = vmatprep.mubr.bf16.mxu0 0
    %1410 = vmatmul.mubr.bf16.gmra.mrb[0].mxu0 %v814
    %v1411 = vpop.f32.mrb[0].mxu0
    %v1412 = vadd.f32 0.0, %v1411
    %v1413 = vpop.f32.mrb[0].mxu0
    %v1414 = vpop.f32.mrb[0].mxu0
    %v1415 = vadd.f32 0.0, %v1414
    %v1416 = vpop.f32.mrb[0].mxu0
    %1417 = vmatprep.mubr.bf16.mxu0 0
    %1418 = vmatmul.mubr.bf16.gmra.mrb[0].mxu0 %v817
    %v1419 = vpop.f32.mrb[0].mxu0
    %v1420 = vadd.f32 0.0, %v1419
    %v1421 = vpop.f32.mrb[0].mxu0
    %v1422 = vpop.f32.mrb[0].mxu0
    %v1423 = vadd.f32 0.0, %v1422
    %v1424 = vpop.f32.mrb[0].mxu0
    %1425 = vmatprep.mubr.bf16.mxu0 0
    %1426 = vmatmul.mubr.bf16.gmra.mrb[0].mxu0 %v820
    %v1427 = vpop.f32.mrb[0].mxu0
    %v1428 = vadd.f32 0.0, %v1427
    %v1429 = vpop.f32.mrb[0].mxu0
    %v1430 = vpop.f32.mrb[0].mxu0
    %v1431 = vadd.f32 0.0, %v1430
    %v1432 = vpop.f32.mrb[0].mxu0
    %1433 = vmatprep.mubr.bf16.mxu0 0
    %1434 = vmatmul.mubr.bf16.gmra.mrb[0].mxu0 %v1177
    %v1435 = vpop.f32.mrb[0].mxu0
    %v1436 = vadd.f32 0.0, %v1435
    %v1437 = vpop.f32.mrb[0].mxu0
    %v1438 = vpop.f32.mrb[0].mxu0
    %v1439 = vadd.f32 0.0, %v1438
    %v1440 = vpop.f32.mrb[0].mxu0
    %1441 = vmatprep.mubr.bf16.mxu0 0
    %1442 = vmatmul.mubr.bf16.gmra.mrb[0].mxu0 %v826
    %v1443 = vpop.f32.mrb[0].mxu0
    %v1444 = vadd.f32 0.0, %v1443
    %v1445 = vpop.f32.mrb[0].mxu0
    %v1446 = vpop.f32.mrb[0].mxu0
    %v1447 = vadd.f32 0.0, %v1446
    %v1448 = vpop.f32.mrb[0].mxu0
    %1449 = vmatprep.mubr.bf16.mxu0 0
    %1450 = vmatmul.mubr.bf16.gmra.mrb[0].mxu0 %v829
    %v1451 = vpop.f32.mrb[0].mxu0
    %v1452 = vadd.f32 0.0, %v1451
    %v1453 = vpop.f32.mrb[0].mxu0
    %v1454 = vpop.f32.mrb[0].mxu0
    %v1455 = vadd.f32 0.0, %v1454
    %v1456 = vpop.f32.mrb[0].mxu0
    %1457 = vmatprep.mubr.bf16.mxu0 0
    %1458 = vmatmul.mubr.bf16.gmra.mrb[0].mxu0 %v832
    %v1459 = vpop.f32.mrb[0].mxu0
    %v1460 = vadd.f32 0.0, %v1459
    %v1461 = vpop.f32.mrb[0].mxu0
    %v1462 = vpop.f32.mrb[0].mxu0
    %v1463 = vadd.f32 0.0, %v1462
    %v1464 = vpop.f32.mrb[0].mxu0
    %1465 = vmatprep.mubr.bf16.mxu0 0
    %1466 = vmatmul.mubr.bf16.gmra.mrb[0].mxu0 %v1180
    %v1467 = vpop.f32.mrb[0].mxu0
    %v1468 = vadd.f32 0.0, %v1467
    %v1469 = vpop.f32.mrb[0].mxu0
    %v1470 = vpop.f32.mrb[0].mxu0
    %v1471 = vadd.f32 0.0, %v1470
    %v1472 = vpop.f32.mrb[0].mxu0
    %1473 = vdwg.mxu0
    %v1474 = vadd.f32 %v872, %v1220
    %v1475 = vadd.f32 %v875, %v1223
    %v1476 = vadd.f32 %v880, %v1228
    %v1477 = vadd.f32 %v883, %v1231
    %v1478 = vadd.f32 %v888, %v1236
    %v1479 = vadd.f32 %v891, %v1239
    %v1480 = vadd.f32 %v896, %v1244
    %v1481 = vadd.f32 %v899, %v1247
    %v1482 = vadd.f32 %v904, %v1252
    %v1483 = vadd.f32 %v907, %v1255
    %v1484 = vadd.f32 %v912, %v1260
    %v1485 = vadd.f32 %v915, %v1263
    %v1486 = vadd.f32 %v920, %v1268
    %v1487 = vadd.f32 %v923, %v1271
    %v1488 = vadd.f32 %v928, %v1276
    %v1489 = vadd.f32 %v931, %v1279
    %v1490 = vadd.f32 %v936, %v1284
    %v1491 = vadd.f32 %v939, %v1287
    %v1492 = vadd.f32 %v944, %v1292
    %v1493 = vadd.f32 %v947, %v1295
    %v1494 = vadd.f32 %v952, %v1300
    %v1495 = vadd.f32 %v955, %v1303
    %v1496 = vadd.f32 %v960, %v1308
    %v1497 = vadd.f32 %v963, %v1311
    %v1498 = vadd.f32 %v968, %v1316
    %v1499 = vadd.f32 %v971, %v1319
    %v1500 = vadd.f32 %v976, %v1324
    %v1501 = vadd.f32 %v979, %v1327
    %v1502 = vadd.f32 %v984, %v1332
    %v1503 = vadd.f32 %v987, %v1335
    %v1504 = vadd.f32 %v992, %v1340
    %v1505 = vadd.f32 %v995, %v1343
    %v1506 = vadd.f32 %v1000, %v1348
    %v1507 = vadd.f32 %v1003, %v1351
    %v1508 = vadd.f32 %v1008, %v1356
    %v1509 = vadd.f32 %v1011, %v1359
    %v1510 = vadd.f32 %v1016, %v1364
    %v1511 = vadd.f32 %v1019, %v1367
    %v1512 = vadd.f32 %v1024, %v1372
    %v1513 = vadd.f32 %v1027, %v1375
    %v1514 = vadd.f32 %v1032, %v1380
    %v1515 = vadd.f32 %v1035, %v1383
    %v1516 = vadd.f32 %v1040, %v1388
    %v1517 = vadd.f32 %v1043, %v1391
    %v1518 = vadd.f32 %v1048, %v1396
    %v1519 = vadd.f32 %v1051, %v1399
    %v1520 = vadd.f32 %v1056, %v1404
    %v1521 = vadd.f32 %v1059, %v1407
    %v1522 = vadd.f32 %v1064, %v1412
    %v1523 = vadd.f32 %v1067, %v1415
    %v1524 = vadd.f32 %v1072, %v1420
    %v1525 = vadd.f32 %v1075, %v1423
    %v1526 = vadd.f32 %v1080, %v1428
    %v1527 = vadd.f32 %v1083, %v1431
    %v1528 = vadd.f32 %v1088, %v1436
    %v1529 = vadd.f32 %v1091, %v1439
    %v1530 = vadd.f32 %v1096, %v1444
    %v1531 = vadd.f32 %v1099, %v1447
    %v1532 = vadd.f32 %v1104, %v1452
    %v1533 = vadd.f32 %v1107, %v1455
    %v1534 = vadd.f32 %v1112, %v1460
    %v1535 = vadd.f32 %v1115, %v1463
    %v1536 = vadd.f32 %v1120, %v1468
    %v1537 = vadd.f32 %v1123, %v1471
    %v1538 = vpack.c.bf16 %v1475, %v1474
    %v1539 = vpack.c.bf16 %v1477, %v1476
    %v1540 = vpack.c.bf16 %v1479, %v1478
    %v1541 = vpack.c.bf16 %v1481, %v1480
    %v1542 = vpack.c.bf16 %v1483, %v1482
    %v1543 = vpack.c.bf16 %v1485, %v1484
    %v1544 = vpack.c.bf16 %v1487, %v1486
    %v1545 = vpack.c.bf16 %v1489, %v1488
    %v1546 = vpack.c.bf16 %v1491, %v1490
    %v1547 = vpack.c.bf16 %v1493, %v1492
    %v1548 = vpack.c.bf16 %v1495, %v1494
    %v1549 = vpack.c.bf16 %v1497, %v1496
    %v1550 = vpack.c.bf16 %v1499, %v1498
    %v1551 = vpack.c.bf16 %v1501, %v1500
    %v1552 = vpack.c.bf16 %v1503, %v1502
    %v1553 = vpack.c.bf16 %v1505, %v1504
    %v1554 = vpack.c.bf16 %v1507, %v1506
    %v1555 = vpack.c.bf16 %v1509, %v1508
    %v1556 = vpack.c.bf16 %v1511, %v1510
    %v1557 = vpack.c.bf16 %v1513, %v1512
    %v1558 = vpack.c.bf16 %v1515, %v1514
    %v1559 = vpack.c.bf16 %v1517, %v1516
    %v1560 = vpack.c.bf16 %v1519, %v1518
    %v1561 = vpack.c.bf16 %v1521, %v1520
    %v1562 = vpack.c.bf16 %v1523, %v1522
    %v1563 = vpack.c.bf16 %v1525, %v1524
    %v1564 = vpack.c.bf16 %v1527, %v1526
    %v1565 = vpack.c.bf16 %v1529, %v1528
    %v1566 = vpack.c.bf16 %v1531, %v1530
    %v1567 = vpack.c.bf16 %v1533, %v1532
    %v1568 = vpack.c.bf16 %v1535, %v1534
    %v1569 = vpack.c.bf16 %v1537, %v1536
    %v1602 = vunpack.c.l.b16 %v1538
    %v1603 = vunpack.c.h.b16 %v1538
    %v1604 = vunpack.c.l.b16 %v1539
    %v1605 = vunpack.c.h.b16 %v1539
    %v1606 = vunpack.c.l.b16 %v1540
    %v1607 = vunpack.c.h.b16 %v1540
    %v1608 = vunpack.c.l.b16 %v1541
    %v1609 = vunpack.c.h.b16 %v1541
    %v1610 = vunpack.c.l.b16 %v1542
    %v1611 = vunpack.c.h.b16 %v1542
    %v1612 = vunpack.c.l.b16 %v1543
    %v1613 = vunpack.c.h.b16 %v1543
    %v1614 = vunpack.c.l.b16 %v1544
    %v1615 = vunpack.c.h.b16 %v1544
    %v1616 = vunpack.c.l.b16 %v1545
    %v1617 = vunpack.c.h.b16 %v1545
    %v1618 = vunpack.c.l.b16 %v1546
    %v1619 = vunpack.c.h.b16 %v1546
    %v1620 = vunpack.c.l.b16 %v1547
    %v1621 = vunpack.c.h.b16 %v1547
    %v1622 = vunpack.c.l.b16 %v1548
    %v1623 = vunpack.c.h.b16 %v1548
    %v1624 = vunpack.c.l.b16 %v1549
    %v1625 = vunpack.c.h.b16 %v1549
    %v1626 = vunpack.c.l.b16 %v1550
    %v1627 = vunpack.c.h.b16 %v1550
    %v1628 = vunpack.c.l.b16 %v1551
    %v1629 = vunpack.c.h.b16 %v1551
    %v1630 = vunpack.c.l.b16 %v1552
    %v1631 = vunpack.c.h.b16 %v1552
    %v1632 = vunpack.c.l.b16 %v1553
    %v1633 = vunpack.c.h.b16 %v1553
    %v1634 = vunpack.c.l.b16 %v1554
    %v1635 = vunpack.c.h.b16 %v1554
    %v1636 = vunpack.c.l.b16 %v1555
    %v1637 = vunpack.c.h.b16 %v1555
    %v1638 = vunpack.c.l.b16 %v1556
    %v1639 = vunpack.c.h.b16 %v1556
    %v1640 = vunpack.c.l.b16 %v1557
    %v1641 = vunpack.c.h.b16 %v1557
    %v1642 = vunpack.c.l.b16 %v1558
    %v1643 = vunpack.c.h.b16 %v1558
    %v1644 = vunpack.c.l.b16 %v1559
    %v1645 = vunpack.c.h.b16 %v1559
    %v1646 = vunpack.c.l.b16 %v1560
    %v1647 = vunpack.c.h.b16 %v1560
    %v1648 = vunpack.c.l.b16 %v1561
    %v1649 = vunpack.c.h.b16 %v1561
    %v1650 = vunpack.c.l.b16 %v1562
    %v1651 = vunpack.c.h.b16 %v1562
    %v1652 = vunpack.c.l.b16 %v1563
    %v1653 = vunpack.c.h.b16 %v1563
    %v1654 = vunpack.c.l.b16 %v1564
    %v1655 = vunpack.c.h.b16 %v1564
    %v1656 = vunpack.c.l.b16 %v1565
    %v1657 = vunpack.c.h.b16 %v1565
    %v1658 = vunpack.c.l.b16 %v1566
    %v1659 = vunpack.c.h.b16 %v1566
    %v1660 = vunpack.c.l.b16 %v1567
    %v1661 = vunpack.c.h.b16 %v1567
    %v1662 = vunpack.c.l.b16 %v1568
    %v1663 = vunpack.c.h.b16 %v1568
    %v1664 = vunpack.c.l.b16 %v1569
    %v1665 = vunpack.c.h.b16 %v1569
    %v1666 = vpack.c.b16 %v1602, %v1602
    %v1667 = vpack.c.b16 %v1603, %v1603
    %v1668 = vpack.c.b16 %v1604, %v1604
    %v1669 = vpack.c.b16 %v1605, %v1605
    %v1670 = vpack.c.b16 %v1606, %v1606
    %v1671 = vpack.c.b16 %v1607, %v1607
    %v1672 = vpack.c.b16 %v1608, %v1608
    %v1673 = vpack.c.b16 %v1609, %v1609
    %v1674 = vpack.c.b16 %v1610, %v1610
    %v1675 = vpack.c.b16 %v1611, %v1611
    %v1676 = vpack.c.b16 %v1612, %v1612
    %v1677 = vpack.c.b16 %v1613, %v1613
    %v1678 = vpack.c.b16 %v1614, %v1614
    %v1679 = vpack.c.b16 %v1615, %v1615
    %v1680 = vpack.c.b16 %v1616, %v1616
    %v1681 = vpack.c.b16 %v1617, %v1617
    %v1682 = vpack.c.b16 %v1618, %v1618
    %v1683 = vpack.c.b16 %v1619, %v1619
    %v1684 = vpack.c.b16 %v1620, %v1620
    %v1685 = vpack.c.b16 %v1621, %v1621
    %v1686 = vpack.c.b16 %v1622, %v1622
    %v1687 = vpack.c.b16 %v1623, %v1623
    %v1688 = vpack.c.b16 %v1624, %v1624
    %v1689 = vpack.c.b16 %v1625, %v1625
    %v1690 = vpack.c.b16 %v1626, %v1626
    %v1691 = vpack.c.b16 %v1627, %v1627
    %v1692 = vpack.c.b16 %v1628, %v1628
    %v1693 = vpack.c.b16 %v1629, %v1629
    %v1694 = vpack.c.b16 %v1630, %v1630
    %v1695 = vpack.c.b16 %v1631, %v1631
    %v1696 = vpack.c.b16 %v1632, %v1632
    %v1697 = vpack.c.b16 %v1633, %v1633
    %v1698 = vpack.c.b16 %v1634, %v1634
    %v1699 = vpack.c.b16 %v1635, %v1635
    %v1700 = vpack.c.b16 %v1636, %v1636
    %v1701 = vpack.c.b16 %v1637, %v1637
    %v1702 = vpack.c.b16 %v1638, %v1638
    %v1703 = vpack.c.b16 %v1639, %v1639
    %v1704 = vpack.c.b16 %v1640, %v1640
    %v1705 = vpack.c.b16 %v1641, %v1641
    %v1706 = vpack.c.b16 %v1642, %v1642
    %v1707 = vpack.c.b16 %v1643, %v1643
    %v1708 = vpack.c.b16 %v1644, %v1644
    %v1709 = vpack.c.b16 %v1645, %v1645
    %v1710 = vpack.c.b16 %v1646, %v1646
    %v1711 = vpack.c.b16 %v1647, %v1647
    %v1712 = vpack.c.b16 %v1648, %v1648
    %v1713 = vpack.c.b16 %v1649, %v1649
    %v1714 = vpack.c.b16 %v1650, %v1650
    %v1715 = vpack.c.b16 %v1651, %v1651
    %v1716 = vpack.c.b16 %v1652, %v1652
    %v1717 = vpack.c.b16 %v1653, %v1653
    %v1718 = vpack.c.b16 %v1654, %v1654
    %v1719 = vpack.c.b16 %v1655, %v1655
    %v1720 = vpack.c.b16 %v1656, %v1656
    %v1721 = vpack.c.b16 %v1657, %v1657
    %v1722 = vpack.c.b16 %v1658, %v1658
    %v1723 = vpack.c.b16 %v1659, %v1659
    %v1724 = vpack.c.b16 %v1660, %v1660
    %v1725 = vpack.c.b16 %v1661, %v1661
    %v1726 = vpack.c.b16 %v1662, %v1662
    %v1727 = vpack.c.b16 %v1663, %v1663
    %v1728 = vpack.c.b16 %v1664, %v1664
    %v1729 = vpack.c.b16 %v1665, %v1665
    %1794 = vst [vmem:[#allocation7] sm:$0xf] %v1666
    %1795 = vst [vmem:[#allocation7 + $0x4] sm:$0xf] %v1667
    %1796 = vst [vmem:[#allocation7 + $0x8] sm:$0xf] %v1668
    %1797 = vst [vmem:[#allocation7 + $0xc] sm:$0xf] %v1669
    %1798 = vst [vmem:[#allocation7 + $0x10] sm:$0xf] %v1670
    %1799 = vst [vmem:[#allocation7 + $0x14] sm:$0xf] %v1671
    %1800 = vst [vmem:[#allocation7 + $0x18] sm:$0xf] %v1672
    %1801 = vst [vmem:[#allocation7 + $0x1c] sm:$0xf] %v1673
    %1802 = vst [vmem:[#allocation7 + $0x20] sm:$0xf] %v1674
    %1803 = vst [vmem:[#allocation7 + $0x24] sm:$0xf] %v1675
    %1804 = vst [vmem:[#allocation7 + $0x28] sm:$0xf] %v1676
    %1805 = vst [vmem:[#allocation7 + $0x2c] sm:$0xf] %v1677
    %1806 = vst [vmem:[#allocation7 + $0x30] sm:$0xf] %v1678
    %1807 = vst [vmem:[#allocation7 + $0x34] sm:$0xf] %v1679
    %1808 = vst [vmem:[#allocation7 + $0x38] sm:$0xf] %v1680
    %1809 = vst [vmem:[#allocation7 + $0x3c] sm:$0xf] %v1681
    %1810 = vst [vmem:[#allocation7 + $0x40] sm:$0xf] %v1682
    %1811 = vst [vmem:[#allocation7 + $0x44] sm:$0xf] %v1683
    %1812 = vst [vmem:[#allocation7 + $0x48] sm:$0xf] %v1684
    %1813 = vst [vmem:[#allocation7 + $0x4c] sm:$0xf] %v1685
    %1814 = vst [vmem:[#allocation7 + $0x50] sm:$0xf] %v1686
    %1815 = vst [vmem:[#allocation7 + $0x54] sm:$0xf] %v1687
    %1816 = vst [vmem:[#allocation7 + $0x58] sm:$0xf] %v1688
    %1817 = vst [vmem:[#allocation7 + $0x5c] sm:$0xf] %v1689
    %1818 = vst [vmem:[#allocation7 + $0x60] sm:$0xf] %v1690
    %1819 = vst [vmem:[#allocation7 + $0x64] sm:$0xf] %v1691
    %1820 = vst [vmem:[#allocation7 + $0x68] sm:$0xf] %v1692
    %1821 = vst [vmem:[#allocation7 + $0x6c] sm:$0xf] %v1693
    %1822 = vst [vmem:[#allocation7 + $0x70] sm:$0xf] %v1694
    %1823 = vst [vmem:[#allocation7 + $0x74] sm:$0xf] %v1695
    %1824 = vst [vmem:[#allocation7 + $0x78] sm:$0xf] %v1696
    %1825 = vst [vmem:[#allocation7 + $0x7c] sm:$0xf] %v1697
    %1826 = vst [vmem:[#allocation7 + $0x80] sm:$0xf] %v1698
    %1827 = vst [vmem:[#allocation7 + $0x84] sm:$0xf] %v1699
    %1828 = vst [vmem:[#allocation7 + $0x88] sm:$0xf] %v1700
    %1829 = vst [vmem:[#allocation7 + $0x8c] sm:$0xf] %v1701
    %1830 = vst [vmem:[#allocation7 + $0x90] sm:$0xf] %v1702
    %1831 = vst [vmem:[#allocation7 + $0x94] sm:$0xf] %v1703
    %1832 = vst [vmem:[#allocation7 + $0x98] sm:$0xf] %v1704
    %1833 = vst [vmem:[#allocation7 + $0x9c] sm:$0xf] %v1705
    %1834 = vst [vmem:[#allocation7 + $0xa0] sm:$0xf] %v1706
    %1835 = vst [vmem:[#allocation7 + $0xa4] sm:$0xf] %v1707
    %1836 = vst [vmem:[#allocation7 + $0xa8] sm:$0xf] %v1708
    %1837 = vst [vmem:[#allocation7 + $0xac] sm:$0xf] %v1709
    %1838 = vst [vmem:[#allocation7 + $0xb0] sm:$0xf] %v1710
    %1839 = vst [vmem:[#allocation7 + $0xb4] sm:$0xf] %v1711
    %1840 = vst [vmem:[#allocation7 + $0xb8] sm:$0xf] %v1712
    %1841 = vst [vmem:[#allocation7 + $0xbc] sm:$0xf] %v1713
    %1842 = vst [vmem:[#allocation7 + $0xc0] sm:$0xf] %v1714
    %1843 = vst [vmem:[#allocation7 + $0xc4] sm:$0xf] %v1715
    %1844 = vst [vmem:[#allocation7 + $0xc8] sm:$0xf] %v1716
    %1845 = vst [vmem:[#allocation7 + $0xcc] sm:$0xf] %v1717
    %1846 = vst [vmem:[#allocation7 + $0xd0] sm:$0xf] %v1718
    %1847 = vst [vmem:[#allocation7 + $0xd4] sm:$0xf] %v1719
    %1848 = vst [vmem:[#allocation7 + $0xd8] sm:$0xf] %v1720
    %1849 = vst [vmem:[#allocation7 + $0xdc] sm:$0xf] %v1721
    %1850 = vst [vmem:[#allocation7 + $0xe0] sm:$0xf] %v1722
    %1851 = vst [vmem:[#allocation7 + $0xe4] sm:$0xf] %v1723
    %1852 = vst [vmem:[#allocation7 + $0xe8] sm:$0xf] %v1724
    %1853 = vst [vmem:[#allocation7 + $0xec] sm:$0xf] %v1725
    %1854 = vst [vmem:[#allocation7 + $0xf0] sm:$0xf] %v1726
    %1855 = vst [vmem:[#allocation7 + $0xf4] sm:$0xf] %v1727
    %1856 = vst [vmem:[#allocation7 + $0xf8] sm:$0xf] %v1728
    %1857 = vst [vmem:[#allocation7 + $0xfc] sm:$0xf] %v1729
    %1858 = vst [vmem:[#allocation8] sm:$0xff] 0.0
    %1859 = vst [vmem:[#allocation10] sm:$0xff] 0.0
    %v1860 = vadd.f32 %v1474, %v1475
    %v1861 = vadd.f32 %v1860, %v1476
    %v1862 = vadd.f32 %v1861, %v1477
    %v1863 = vadd.f32 %v1862, %v1478
    %v1864 = vadd.f32 %v1863, %v1479
    %v1865 = vadd.f32 %v1864, %v1480
    %v1866 = vadd.f32 %v1865, %v1481
    %v1867 = vadd.f32 %v1866, %v1482
    %v1868 = vadd.f32 %v1867, %v1483
    %v1869 = vadd.f32 %v1868, %v1484
    %v1870 = vadd.f32 %v1869, %v1485
    %v1871 = vadd.f32 %v1870, %v1486
    %v1872 = vadd.f32 %v1871, %v1487
    %v1873 = vadd.f32 %v1872, %v1488
    %v1874 = vadd.f32 %v1873, %v1489
    %v1875 = vadd.f32 %v1874, %v1490
    %v1876 = vadd.f32 %v1875, %v1491
    %v1877 = vadd.f32 %v1876, %v1492
    %v1878 = vadd.f32 %v1877, %v1493
    %v1879 = vadd.f32 %v1878, %v1494
    %v1880 = vadd.f32 %v1879, %v1495
    %v1881 = vadd.f32 %v1880, %v1496
    %v1882 = vadd.f32 %v1881, %v1497
    %v1883 = vadd.f32 %v1882, %v1498
    %v1884 = vadd.f32 %v1883, %v1499
    %v1885 = vadd.f32 %v1884, %v1500
    %v1886 = vadd.f32 %v1885, %v1501
    %v1887 = vadd.f32 %v1886, %v1502
    %v1888 = vadd.f32 %v1887, %v1503
    %v1889 = vadd.f32 %v1888, %v1504
    %v1890 = vadd.f32 %v1889, %v1505
    %v1891 = vadd.f32 %v1890, %v1506
    %v1892 = vadd.f32 %v1891, %v1507
    %v1893 = vadd.f32 %v1892, %v1508
    %v1894 = vadd.f32 %v1893, %v1509
    %v1895 = vadd.f32 %v1894, %v1510
    %v1896 = vadd.f32 %v1895, %v1511
    %v1897 = vadd.f32 %v1896, %v1512
    %v1898 = vadd.f32 %v1897, %v1513
    %v1899 = vadd.f32 %v1898, %v1514
    %v1900 = vadd.f32 %v1899, %v1515
    %v1901 = vadd.f32 %v1900, %v1516
    %v1902 = vadd.f32 %v1901, %v1517
    %v1903 = vadd.f32 %v1902, %v1518
    %v1904 = vadd.f32 %v1903, %v1519
    %v1905 = vadd.f32 %v1904, %v1520
    %v1906 = vadd.f32 %v1905, %v1521
    %v1907 = vadd.f32 %v1906, %v1522
    %v1908 = vadd.f32 %v1907, %v1523
    %v1909 = vadd.f32 %v1908, %v1524
    %v1910 = vadd.f32 %v1909, %v1525
    %v1911 = vadd.f32 %v1910, %v1526
    %v1912 = vadd.f32 %v1911, %v1527
    %v1913 = vadd.f32 %v1912, %v1528
    %v1914 = vadd.f32 %v1913, %v1529
    %v1915 = vadd.f32 %v1914, %v1530
    %v1916 = vadd.f32 %v1915, %v1531
    %v1917 = vadd.f32 %v1916, %v1532
    %v1918 = vadd.f32 %v1917, %v1533
    %v1919 = vadd.f32 %v1918, %v1534
    %v1920 = vadd.f32 %v1919, %v1535
    %v1921 = vadd.f32 %v1920, %v1536
    %v1922 = vadd.f32 %v1921, %v1537
    %v1923 = vrot.slane %v1922, 4
    %v1924 = vadd.f32 %v1922, %v1923
    %v1925 = vrot.slane %v1924, 2
    %v1926 = vadd.f32 %v1924, %v1925
    %v1927 = vrot.slane %v1926, 1
    %v1928 = vadd.f32 %v1926, %v1927
    %1929 = vst [vmem:[#allocation8] sm:$0x1] %v1928
    %v1930 = vmul.f32 %v1474, %v1474
    %v1931 = vmul.f32 %v1475, %v1475
    %v1932 = vmul.f32 %v1476, %v1476
    %v1933 = vmul.f32 %v1477, %v1477
    %v1934 = vmul.f32 %v1478, %v1478
    %v1935 = vmul.f32 %v1479, %v1479
    %v1936 = vmul.f32 %v1480, %v1480
    %v1937 = vmul.f32 %v1481, %v1481
    %v1938 = vmul.f32 %v1482, %v1482
    %v1939 = vmul.f32 %v1483, %v1483
    %v1940 = vmul.f32 %v1484, %v1484
    %v1941 = vmul.f32 %v1485, %v1485
    %v1942 = vmul.f32 %v1486, %v1486
    %v1943 = vmul.f32 %v1487, %v1487
    %v1944 = vmul.f32 %v1488, %v1488
    %v1945 = vmul.f32 %v1489, %v1489
    %v1946 = vmul.f32 %v1490, %v1490
    %v1947 = vmul.f32 %v1491, %v1491
    %v1948 = vmul.f32 %v1492, %v1492
    %v1949 = vmul.f32 %v1493, %v1493
    %v1950 = vmul.f32 %v1494, %v1494
    %v1951 = vmul.f32 %v1495, %v1495
    %v1952 = vmul.f32 %v1496, %v1496
    %v1953 = vmul.f32 %v1497, %v1497
    %v1954 = vmul.f32 %v1498, %v1498
    %v1955 = vmul.f32 %v1499, %v1499
    %v1956 = vmul.f32 %v1500, %v1500
    %v1957 = vmul.f32 %v1501, %v1501
    %v1958 = vmul.f32 %v1502, %v1502
    %v1959 = vmul.f32 %v1503, %v1503
    %v1960 = vmul.f32 %v1504, %v1504
    %v1961 = vmul.f32 %v1505, %v1505
    %v1962 = vmul.f32 %v1506, %v1506
    %v1963 = vmul.f32 %v1507, %v1507
    %v1964 = vmul.f32 %v1508, %v1508
    %v1965 = vmul.f32 %v1509, %v1509
    %v1966 = vmul.f32 %v1510, %v1510
    %v1967 = vmul.f32 %v1511, %v1511
    %v1968 = vmul.f32 %v1512, %v1512
    %v1969 = vmul.f32 %v1513, %v1513
    %v1970 = vmul.f32 %v1514, %v1514
    %v1971 = vmul.f32 %v1515, %v1515
    %v1972 = vmul.f32 %v1516, %v1516
    %v1973 = vmul.f32 %v1517, %v1517
    %v1974 = vmul.f32 %v1518, %v1518
    %v1975 = vmul.f32 %v1519, %v1519
    %v1976 = vmul.f32 %v1520, %v1520
    %v1977 = vmul.f32 %v1521, %v1521
    %v1978 = vmul.f32 %v1522, %v1522
    %v1979 = vmul.f32 %v1523, %v1523
    %v1980 = vmul.f32 %v1524, %v1524
    %v1981 = vmul.f32 %v1525, %v1525
    %v1982 = vmul.f32 %v1526, %v1526
    %v1983 = vmul.f32 %v1527, %v1527
    %v1984 = vmul.f32 %v1528, %v1528
    %v1985 = vmul.f32 %v1529, %v1529
    %v1986 = vmul.f32 %v1530, %v1530
    %v1987 = vmul.f32 %v1531, %v1531
    %v1988 = vmul.f32 %v1532, %v1532
    %v1989 = vmul.f32 %v1533, %v1533
    %v1990 = vmul.f32 %v1534, %v1534
    %v1991 = vmul.f32 %v1535, %v1535
    %v1992 = vmul.f32 %v1536, %v1536
    %v1993 = vmul.f32 %v1537, %v1537
    %v1994 = vadd.f32 %v1930, %v1931
    %v1995 = vadd.f32 %v1994, %v1932
    %v1996 = vadd.f32 %v1995, %v1933
    %v1997 = vadd.f32 %v1996, %v1934
    %v1998 = vadd.f32 %v1997, %v1935
    %v1999 = vadd.f32 %v1998, %v1936
    %v2000 = vadd.f32 %v1999, %v1937
    %v2001 = vadd.f32 %v2000, %v1938
    %v2002 = vadd.f32 %v2001, %v1939
    %v2003 = vadd.f32 %v2002, %v1940
    %v2004 = vadd.f32 %v2003, %v1941
    %v2005 = vadd.f32 %v2004, %v1942
    %v2006 = vadd.f32 %v2005, %v1943
    %v2007 = vadd.f32 %v2006, %v1944
    %v2008 = vadd.f32 %v2007, %v1945
    %v2009 = vadd.f32 %v2008, %v1946
    %v2010 = vadd.f32 %v2009, %v1947
    %v2011 = vadd.f32 %v2010, %v1948
    %v2012 = vadd.f32 %v2011, %v1949
    %v2013 = vadd.f32 %v2012, %v1950
    %v2014 = vadd.f32 %v2013, %v1951
    %v2015 = vadd.f32 %v2014, %v1952
    %v2016 = vadd.f32 %v2015, %v1953
    %v2017 = vadd.f32 %v2016, %v1954
    %v2018 = vadd.f32 %v2017, %v1955
    %v2019 = vadd.f32 %v2018, %v1956
    %v2020 = vadd.f32 %v2019, %v1957
    %v2021 = vadd.f32 %v2020, %v1958
    %v2022 = vadd.f32 %v2021, %v1959
    %v2023 = vadd.f32 %v2022, %v1960
    %v2024 = vadd.f32 %v2023, %v1961
    %v2025 = vadd.f32 %v2024, %v1962
    %v2026 = vadd.f32 %v2025, %v1963
    %v2027 = vadd.f32 %v2026, %v1964
    %v2028 = vadd.f32 %v2027, %v1965
    %v2029 = vadd.f32 %v2028, %v1966
    %v2030 = vadd.f32 %v2029, %v1967
    %v2031 = vadd.f32 %v2030, %v1968
    %v2032 = vadd.f32 %v2031, %v1969
    %v2033 = vadd.f32 %v2032, %v1970
    %v2034 = vadd.f32 %v2033, %v1971
    %v2035 = vadd.f32 %v2034, %v1972
    %v2036 = vadd.f32 %v2035, %v1973
    %v2037 = vadd.f32 %v2036, %v1974
    %v2038 = vadd.f32 %v2037, %v1975
    %v2039 = vadd.f32 %v2038, %v1976
    %v2040 = vadd.f32 %v2039, %v1977
    %v2041 = vadd.f32 %v2040, %v1978
    %v2042 = vadd.f32 %v2041, %v1979
    %v2043 = vadd.f32 %v2042, %v1980
    %v2044 = vadd.f32 %v2043, %v1981
    %v2045 = vadd.f32 %v2044, %v1982
    %v2046 = vadd.f32 %v2045, %v1983
    %v2047 = vadd.f32 %v2046, %v1984
    %v2048 = vadd.f32 %v2047, %v1985
    %v2049 = vadd.f32 %v2048, %v1986
    %v2050 = vadd.f32 %v2049, %v1987
    %v2051 = vadd.f32 %v2050, %v1988
    %v2052 = vadd.f32 %v2051, %v1989
    %v2053 = vadd.f32 %v2052, %v1990
    %v2054 = vadd.f32 %v2053, %v1991
    %v2055 = vadd.f32 %v2054, %v1992
    %v2056 = vadd.f32 %v2055, %v1993
    %v2057 = vrot.slane %v2056, 4
    %v2058 = vadd.f32 %v2056, %v2057
    %v2059 = vrot.slane %v2058, 2
    %v2060 = vadd.f32 %v2058, %v2059
    %v2061 = vrot.slane %v2060, 1
    %v2062 = vadd.f32 %v2060, %v2061
    %2063 = vst [vmem:[#allocation10] sm:$0x1] %v2062
    // Predicated region
    $region18: #{tpu_custom_call.1} parent=1 // pred_check
      _
    $region19: #{tpu_custom_call.1} parent=1 // pred_check_branch
      %2065 = sbr.rel (0) target = $region21
    $region20: #{tpu_custom_call.1} parent=1 // pred_region
      %s2067 = ssub.s32 4096, 4096
      %2068 = vsyncadd [#allocation4], %s2067
      %s2069 = sshll.u32 [#allocation7], 4
      %s2070 = int_to_ptr.vmem [resolvable:$true] %s2069
      %2075 = dma.vmem_to_hbm [thread:$0]  %s2070, 4096, %s2, [#allocation4], 64, 64, 4
    $region21: #{tpu_custom_call.1} parent=1 // pred_fallthru
      _
    // Predicated region
    $region22: #{tpu_custom_call.1} parent=1 // pred_check
      _
    $region23: #{tpu_custom_call.1} parent=1 // pred_check_branch
      %2077 = sbr.rel (0) target = $region25
    $region24: #{tpu_custom_call.1} parent=1 // pred_region
      %s2079 = ssub.s32 128, 128
      %2080 = vsyncadd [#allocation9], %s2079
      %s2082 = sshll.u32 [#allocation8], 4
      %s2083 = int_to_ptr.vmem [resolvable:$true] %s2082
      %2085 = dma.vmem_to_hbm [thread:$0]  %s2083, 128, %s3, [#allocation9]
    $region25: #{tpu_custom_call.1} parent=1 // pred_fallthru
      _
    // Predicated region
    $region26: #{tpu_custom_call.1} parent=1 // pred_check
      _
    $region27: #{tpu_custom_call.1} parent=1 // pred_check_branch
      %2087 = sbr.rel (0) target = $region29
    $region28: #{tpu_custom_call.1} parent=1 // pred_region
      %s2089 = ssub.s32 128, 128
      %2090 = vsyncadd [#allocation9], %s2089
      %s2092 = sshll.u32 [#allocation10], 4
      %s2093 = int_to_ptr.vmem [resolvable:$true] %s2092
      %2095 = dma.vmem_to_hbm [thread:$0]  %s2093, 128, %s4, [#allocation9]
    $region29: #{tpu_custom_call.1} parent=1 // pred_fallthru
      _
    // Predicated region
    $region30: #{tpu_custom_call.1} parent=1 // pred_check
      _
    $region31: #{tpu_custom_call.1} parent=1 // pred_check_branch
      %2097 = sbr.rel (0) target = $region33
    $region32: #{tpu_custom_call.1} parent=1 // pred_region
      %2098 = dma.done [#allocation4], 4096
    $region33: #{tpu_custom_call.1} parent=1 // pred_fallthru
      _
    // Predicated region
    $region34: #{tpu_custom_call.1} parent=1 // pred_check
      _
    $region35: #{tpu_custom_call.1} parent=1 // pred_check_branch
      %2100 = sbr.rel (0) target = $region37
    $region36: #{tpu_custom_call.1} parent=1 // pred_region
      %2101 = dma.done [#allocation9], 128
    $region37: #{tpu_custom_call.1} parent=1 // pred_fallthru
      _
    // Predicated region
    $region38: #{tpu_custom_call.1} parent=1 // pred_check
      _
    $region39: #{tpu_custom_call.1} parent=1 // pred_check_branch
      %2103 = sbr.rel (0) target = $region41
    $region40: #{tpu_custom_call.1} parent=1 // pred_region
      %2104 = dma.done [#allocation9], 128
    $region41: #{tpu_custom_call.1} parent=1 // pred_fallthru
      _
    %2105 = vsyncpa [#allocation3], 1
    %2106 = vsyncpa [#allocation6], 1
    %2107 = vsyncpa [#allocation4], 1
    %2108 = vsyncpa [#allocation9], 1

</llo_original>
